<compile_context>
chip_gen: v5e
topology: v5e:2x2
jax: 0.10.0
libtpu: 0.0.40
codegen_flags: <defaults>
</compile_context>

<pallas_src>
import numpy as np
import jax
import jax.numpy as jnp
from jax.experimental import pallas as pl
from jax.experimental.pallas import tpu as pltpu

# ---- model / layout constants -------------------------------------------------------
NLAYERS = 5
IN_CH   = 16
HID     = 32        # hidden channels == fc width
OUT     = 4
H0      = 4         # input spatial size (4x4)
WC      = 11        # canvas row stride (9x9 fits: max lane 8*11+8 = 96 < 128)
CPAD    = 32        # channel rows (sublane axis)
SPAD    = 128       # canvas lanes
OPAD    = 8         # padded output lanes

# consts slab row layout (f32, 128 lanes wide)
MISC_R  = 0                         # rows 0..31 : col l (<5) conv bias, col 5 b1,
                                    #              cols 8..15 w2^T (padded), row 0 cols 16..23 b2 (padded)
MASK_R  = 32                        # rows 32..51: tap validity masks, row = 32 + 4*l + t
CONVW_R = 64                        # rows 64..223: fused conv weights, layer l at 64 + 32*l
CONST_ROWS = CONVW_R + NLAYERS * CPAD   # 224

# tap order t = di*2 + dj ; lane shift so that rolled[o] = act[o - shift]
#   output (i,j) needs input (i+di-1, j+dj-1)  ->  shift = (1-di)*WC + (1-dj)
TAP_SHIFTS = tuple((1 - di) * WC + (1 - dj) for di in range(2) for dj in range(2))   # (12, 11, 1, 0)


# ----------------------------------------------------------------------------- kernel
def fused_forward_kernel(x_ref, c_ref, w1_ref, o_ref):
    # x_ref : (32, 128)  f32  input canvas [channel, i*WC + j]
    # c_ref : (224, 128) f32  misc | tap masks | fused conv weights
    # w1_ref: (1024,128) bf16 fc1 weights, row = 32*c + n, lane = i*WC + j (zero elsewhere)
    # o_ref : (1, 8)     f32
    act = x_ref[...]                                                       # (32, 128) f32

    # ---- conv stack: one (32,128)x(128,128) MXU matmul per layer ---------------------
    for l in range(NLAYERS):
        taps = []
        for t in range(4):
            shift = TAP_SHIFTS[t]
            shifted = pltpu.roll(act, shift, 1) if shift else act          # XLU lane rotate
            mask = c_ref[MASK_R + 4 * l + t: MASK_R + 4 * l + t + 1, :]    # (1, 128) 0/1
            taps.append(shifted * mask)                                    # zero-pad + kill stale lanes
        patch = jnp.concatenate(taps, axis=0)                              # (128, 128): row t*32 + cin
        w_l  = c_ref[pl.ds(CONVW_R + CPAD * l, CPAD), :]                   # (32, 128): col t*32 + cin
        bias = c_ref[0:CPAD, l:l + 1]                                      # (32, 1)
        y = jnp.dot(w_l, patch, preferred_element_type=jnp.float32)        # (32, 128) MXU
        act = jnp.maximum(y + bias, 0.0)

    # ---- fc1: stream channel blocks (no (32,32,128) temporary, no spills) ------------
    partial = jnp.zeros((CPAD, SPAD), jnp.float32)
    for c in range(HID):
        w1c = w1_ref[pl.ds(HID * c, HID), :].astype(jnp.float32)           # (32, 128)
        partial = partial + w1c * act[c:c + 1, :]                          # broadcast row c
    h1 = jnp.sum(partial, axis=1, keepdims=True)                           # (32, 1)  one lane reduce
    b1 = c_ref[0:CPAD, 5:6]                                                # (32, 1)
    h1 = jnp.maximum(h1 + b1, 0.0)

    # ---- fc2 --------------------------------------------------------------------------
    w2t = c_ref[0:CPAD, 8:8 + OPAD]                                        # (32, 8) [n, o] (cols 4..7 zero)
    b2  = c_ref[0:1, 16:16 + OPAD]                                         # (1, 8)
    o_ref[...] = jnp.sum(w2t * h1, axis=0, keepdims=True) + b2             # (1, 8)


# ------------------------------------------------------------------- one-time host prep
def prepare_params(convs, fc1, fc2):
    """Pack all weights/biases/masks into two kernel-ready slabs (one f32, one bf16)."""
    consts = np.zeros((CONST_ROWS, SPAD), np.float32)

    # misc block (rows 0..31)
    for l, (_, b) in enumerate(convs):
        b = np.asarray(b, np.float32)
        consts[:b.shape[0], l] = b
    w1, b1 = fc1
    w2, b2 = fc2
    consts[:HID, 5] = np.asarray(b1, np.float32)
    consts[:HID, 8:8 + OUT] = np.asarray(w2, np.float32).T                 # w2^T : (32, 4)
    consts[0, 16:16 + OUT] = np.asarray(b2, np.float32)

    # tap validity masks (rows 32..51): 1 iff input pos (i+di-1, j+dj-1) inside the
    # layer's input region -> implements zero padding AND blocks stale-lane leakage.
    for l in range(NLAYERS):
        hin = H0 + l
        for di in range(2):
            for dj in range(2):
                row = MASK_R + 4 * l + di * 2 + dj
                for o in range(SPAD):
                    i, j = o // WC, o % WC
                    ih, iw = i + di - 1, j + dj - 1
                    if 0 <= ih < hin and 0 <= iw < hin:
                        consts[row, o] = 1.0

    # fused conv weights (rows 64..223): layer l block is (32 cout x 128), col = t*32 + cin
    for l, (w, _) in enumerate(convs):
        w = np.asarray(w, np.float32)
        cout, cin = w.shape[0], w.shape[1]
        base = CONVW_R + CPAD * l
        for di in range(2):
            for dj in range(2):
                t = di * 2 + dj
                consts[base:base + cout, t * CPAD: t * CPAD + cin] = w[:, :, di, dj]

    # fc1 slab (1024, 128) bf16: row = 32*c + n, lane = i*WC + j (canvas), zero elsewhere.
    w1 = np.asarray(w1, np.float32).reshape(HID, HID, 9, 9)                # (n, c, i, j)
    w1slab = np.zeros((HID * HID, SPAD), np.float32)
    for c in range(HID):
        for i in range(9):
            w1slab[HID * c: HID * (c + 1), i * WC: i * WC + 9] = w1[:, c, i, :]

    return jnp.asarray(consts), jnp.asarray(w1slab, dtype=jnp.bfloat16)


# ----------------------------------------------------------------------------- forward
@jax.jit
def model_forward(x, consts, w1slab):
    # x: (1, 16, 4, 4) NCHW  ->  (32, 128) canvas slab [channel, i*WC + j]
    cin, h, w = x.shape[1], x.shape[2], x.shape[3]
    xc = x[0].astype(jnp.float32)
    xc = jnp.pad(xc, ((0, CPAD - cin), (0, 0), (0, WC - w)))               # (32, 4, 11)
    slab = jnp.pad(xc.reshape(CPAD, h * WC), ((0, 0), (0, SPAD - h * WC))) # (32, 128)

    out = pl.pallas_call(
        fused_forward_kernel,
        out_shape=jax.ShapeDtypeStruct((1, OPAD), jnp.float32),
    )(slab, consts, w1slab)
    return out[0, :OUT]


# ------------------------------------------------------------------ init + pure-JAX ref
def init_params(key, in_ch=IN_CH, hid=HID, outsize=OUT):
    """Deterministic init matching the module (weights ~ N(0, 0.05), PyTorch-default biases)."""
    keys = jax.random.split(key, 14)
    ki = 0
    convs = []
    channels = [in_ch] + [hid] * NLAYERS
    for i in range(NLAYERS):
        cin, cout = channels[i], channels[i + 1]
        w = 0.05 * jax.random.normal(keys[ki], (cout, cin, 2, 2), jnp.float32); ki += 1
        bound = 1.0 / float(np.sqrt(cin * 4))
        b = jax.random.uniform(keys[ki], (cout,), jnp.float32, -bound, bound); ki += 1
        convs.append((w, b))
    in_feat = hid * 9 * 9
    w1 = 0.05 * jax.random.normal(keys[ki], (hid, in_feat), jnp.float32); ki += 1
    b1 = jax.random.uniform(keys[ki], (hid,), jnp.float32,
                            -1.0 / float(np.sqrt(in_feat)), 1.0 / float(np.sqrt(in_feat))); ki += 1
    w2 = 0.05 * jax.random.normal(keys[ki], (outsize, hid), jnp.float32); ki += 1
    b2 = jax.random.uniform(keys[ki], (outsize,), jnp.float32,
                            -1.0 / float(np.sqrt(hid)), 1.0 / float(np.sqrt(hid))); ki += 1
    return convs, (w1, b1), (w2, b2)


def reference_forward(x, convs, fc1, fc2):
    """Plain-JAX reference (same math as the PyTorch module) for a sanity check."""
    h = x[0]
    for (w, b) in convs:
        cout, cin = w.shape[0], w.shape[1]
        H, W = h.shape[1], h.shape[2]
        hp = jnp.pad(h, ((0, 0), (1, 1), (1, 1)))
        Hout, Wout = H + 1, W + 1
        cols = [hp[:, di:di + Hout, dj:dj + Wout] for di in range(2) for dj in range(2)]
        pmat = jnp.stack(cols, axis=1).reshape(cin * 4, Hout * Wout)
        y = w.reshape(cout, cin * 4) @ pmat + b[:, None]
        h = jnp.maximum(y, 0.0).reshape(cout, Hout, Wout)
    flat = h.reshape(-1)
    w1, b1 = fc1
    w2, b2 = fc2
    z = jnp.maximum(w1 @ flat + b1, 0.0)
    return w2 @ z + b2


if __name__ == "__main__":
    key = jax.random.PRNGKey(0)
    pkey, xkey = jax.random.split(key)
    convs, fc1, fc2 = init_params(pkey)
    consts, w1slab = prepare_params(convs, fc1, fc2)

    x = jax.random.normal(xkey, (1, IN_CH, H0, H0), jnp.float32)

    out = jax.block_until_ready(model_forward(x, consts, w1slab))
    assert out.shape == (OUT,) and out.dtype == jnp.float32

    ref = jax.block_until_ready(reference_forward(x, convs, fc1, fc2))
    np.testing.assert_allclose(np.asarray(out), np.asarray(ref), rtol=2e-2, atol=1e-3)

    print("KERNEL_OK")
</pallas_src>

<mosaic_0001>
module attributes {stable_mosaic.version = 11 : i64} {
  func.func @fused_forward_kernel(%arg0: memref<32x128xf32, #tpu.memory_space<vmem>>, %arg1: memref<224x128xf32, #tpu.memory_space<vmem>>, %arg2: memref<1024x128xbf16, #tpu.memory_space<vmem>>, %arg3: memref<1x8xf32, #tpu.memory_space<vmem>>) attributes {dimension_semantics = [], scalar_prefetch = 0 : i64, scratch_operands = 0 : i64, tpu.core_type = #tpu.core_type<tc>} {
    %c0 = arith.constant 0 : index
    %c0_0 = arith.constant 0 : index
    %0 = vector.load %arg0[%c0, %c0_0] : memref<32x128xf32, #tpu.memory_space<vmem>>, vector<32x128xf32>
    %c12_i32 = arith.constant 12 : i32
    %1 = tpu.dynamic_rotate %0 by %c12_i32 dim 1 : vector<32x128xf32>, i32 -> vector<32x128xf32>
    %c32 = arith.constant 32 : index
    %c0_1 = arith.constant 0 : index
    %2 = vector.load %arg1[%c32, %c0_1] : memref<224x128xf32, #tpu.memory_space<vmem>>, vector<1x128xf32>
    %3 = vector.broadcast %2 : vector<1x128xf32> to vector<32x128xf32>
    %4 = arith.mulf %1, %3 : vector<32x128xf32>
    %c11_i32 = arith.constant 11 : i32
    %5 = tpu.dynamic_rotate %0 by %c11_i32 dim 1 : vector<32x128xf32>, i32 -> vector<32x128xf32>
    %c33 = arith.constant 33 : index
    %c0_2 = arith.constant 0 : index
    %6 = vector.load %arg1[%c33, %c0_2] : memref<224x128xf32, #tpu.memory_space<vmem>>, vector<1x128xf32>
    %7 = vector.broadcast %6 : vector<1x128xf32> to vector<32x128xf32>
    %8 = arith.mulf %5, %7 : vector<32x128xf32>
    %c1_i32 = arith.constant 1 : i32
    %9 = tpu.dynamic_rotate %0 by %c1_i32 dim 1 : vector<32x128xf32>, i32 -> vector<32x128xf32>
    %c34 = arith.constant 34 : index
    %c0_3 = arith.constant 0 : index
    %10 = vector.load %arg1[%c34, %c0_3] : memref<224x128xf32, #tpu.memory_space<vmem>>, vector<1x128xf32>
    %11 = vector.broadcast %10 : vector<1x128xf32> to vector<32x128xf32>
    %12 = arith.mulf %9, %11 : vector<32x128xf32>
    %c35 = arith.constant 35 : index
    %c0_4 = arith.constant 0 : index
    %13 = vector.load %arg1[%c35, %c0_4] : memref<224x128xf32, #tpu.memory_space<vmem>>, vector<1x128xf32>
    %14 = vector.broadcast %13 : vector<1x128xf32> to vector<32x128xf32>
    %15 = arith.mulf %0, %14 : vector<32x128xf32>
    %16 = tpu.concatenate %4, %8, %12, %15 in 0 : vector<32x128xf32>, vector<32x128xf32>, vector<32x128xf32>, vector<32x128xf32> -> vector<128x128xf32>
    %c64 = arith.constant 64 : index
    %c0_5 = arith.constant 0 : index
    %17 = vector.load %arg1[%c64, %c0_5] : memref<224x128xf32, #tpu.memory_space<vmem>>, vector<32x128xf32>
    %c0_6 = arith.constant 0 : index
    %c0_7 = arith.constant 0 : index
    %18 = vector.load %arg1[%c0_6, %c0_7] : memref<224x128xf32, #tpu.memory_space<vmem>>, vector<32x1xf32>
    %cst = arith.constant dense<0.000000e+00> : vector<32x128xf32>
    %19 = tpu.matmul %17, %16, %cst {dimension_numbers = #tpu.dot_dimension_numbers<[1], [0], [0], [1], [0, 0, 1, 1], [], []>} : vector<32x128xf32>, vector<128x128xf32>, vector<32x128xf32> -> vector<32x128xf32>
    %20 = vector.broadcast %18 : vector<32x1xf32> to vector<32x128xf32>
    %21 = arith.addf %19, %20 : vector<32x128xf32>
    %cst_8 = arith.constant 0.000000e+00 : f32
    %22 = vector.broadcast %cst_8 : f32 to vector<32x128xf32>
    %23 = arith.maximumf %21, %22 : vector<32x128xf32>
    %c12_i32_9 = arith.constant 12 : i32
    %24 = tpu.dynamic_rotate %23 by %c12_i32_9 dim 1 : vector<32x128xf32>, i32 -> vector<32x128xf32>
    %c36 = arith.constant 36 : index
    %c0_10 = arith.constant 0 : index
    %25 = vector.load %arg1[%c36, %c0_10] : memref<224x128xf32, #tpu.memory_space<vmem>>, vector<1x128xf32>
    %26 = vector.broadcast %25 : vector<1x128xf32> to vector<32x128xf32>
    %27 = arith.mulf %24, %26 : vector<32x128xf32>
    %c11_i32_11 = arith.constant 11 : i32
    %28 = tpu.dynamic_rotate %23 by %c11_i32_11 dim 1 : vector<32x128xf32>, i32 -> vector<32x128xf32>
    %c37 = arith.constant 37 : index
    %c0_12 = arith.constant 0 : index
    %29 = vector.load %arg1[%c37, %c0_12] : memref<224x128xf32, #tpu.memory_space<vmem>>, vector<1x128xf32>
    %30 = vector.broadcast %29 : vector<1x128xf32> to vector<32x128xf32>
    %31 = arith.mulf %28, %30 : vector<32x128xf32>
    %c1_i32_13 = arith.constant 1 : i32
    %32 = tpu.dynamic_rotate %23 by %c1_i32_13 dim 1 : vector<32x128xf32>, i32 -> vector<32x128xf32>
    %c38 = arith.constant 38 : index
    %c0_14 = arith.constant 0 : index
    %33 = vector.load %arg1[%c38, %c0_14] : memref<224x128xf32, #tpu.memory_space<vmem>>, vector<1x128xf32>
    %34 = vector.broadcast %33 : vector<1x128xf32> to vector<32x128xf32>
    %35 = arith.mulf %32, %34 : vector<32x128xf32>
    %c39 = arith.constant 39 : index
    %c0_15 = arith.constant 0 : index
    %36 = vector.load %arg1[%c39, %c0_15] : memref<224x128xf32, #tpu.memory_space<vmem>>, vector<1x128xf32>
    %37 = vector.broadcast %36 : vector<1x128xf32> to vector<32x128xf32>
    %38 = arith.mulf %23, %37 : vector<32x128xf32>
    %39 = tpu.concatenate %27, %31, %35, %38 in 0 : vector<32x128xf32>, vector<32x128xf32>, vector<32x128xf32>, vector<32x128xf32> -> vector<128x128xf32>
    %c96 = arith.constant 96 : index
    %c0_16 = arith.constant 0 : index
    %40 = vector.load %arg1[%c96, %c0_16] : memref<224x128xf32, #tpu.memory_space<vmem>>, vector<32x128xf32>
    %c0_17 = arith.constant 0 : index
    %c1 = arith.constant 1 : index
    %41 = vector.load %arg1[%c0_17, %c1] : memref<224x128xf32, #tpu.memory_space<vmem>>, vector<32x1xf32>
    %cst_18 = arith.constant dense<0.000000e+00> : vector<32x128xf32>
    %42 = tpu.matmul %40, %39, %cst_18 {dimension_numbers = #tpu.dot_dimension_numbers<[1], [0], [0], [1], [0, 0, 1, 1], [], []>} : vector<32x128xf32>, vector<128x128xf32>, vector<32x128xf32> -> vector<32x128xf32>
    %43 = vector.broadcast %41 : vector<32x1xf32> to vector<32x128xf32>
    %44 = arith.addf %42, %43 : vector<32x128xf32>
    %cst_19 = arith.constant 0.000000e+00 : f32
    %45 = vector.broadcast %cst_19 : f32 to vector<32x128xf32>
    %46 = arith.maximumf %44, %45 : vector<32x128xf32>
    %c12_i32_20 = arith.constant 12 : i32
    %47 = tpu.dynamic_rotate %46 by %c12_i32_20 dim 1 : vector<32x128xf32>, i32 -> vector<32x128xf32>
    %c40 = arith.constant 40 : index
    %c0_21 = arith.constant 0 : index
    %48 = vector.load %arg1[%c40, %c0_21] : memref<224x128xf32, #tpu.memory_space<vmem>>, vector<1x128xf32>
    %49 = vector.broadcast %48 : vector<1x128xf32> to vector<32x128xf32>
    %50 = arith.mulf %47, %49 : vector<32x128xf32>
    %c11_i32_22 = arith.constant 11 : i32
    %51 = tpu.dynamic_rotate %46 by %c11_i32_22 dim 1 : vector<32x128xf32>, i32 -> vector<32x128xf32>
    %c41 = arith.constant 41 : index
    %c0_23 = arith.constant 0 : index
    %52 = vector.load %arg1[%c41, %c0_23] : memref<224x128xf32, #tpu.memory_space<vmem>>, vector<1x128xf32>
    %53 = vector.broadcast %52 : vector<1x128xf32> to vector<32x128xf32>
    %54 = arith.mulf %51, %53 : vector<32x128xf32>
    %c1_i32_24 = arith.constant 1 : i32
    %55 = tpu.dynamic_rotate %46 by %c1_i32_24 dim 1 : vector<32x128xf32>, i32 -> vector<32x128xf32>
    %c42 = arith.constant 42 : index
    %c0_25 = arith.constant 0 : index
    %56 = vector.load %arg1[%c42, %c0_25] : memref<224x128xf32, #tpu.memory_space<vmem>>, vector<1x128xf32>
    %57 = vector.broadcast %56 : vector<1x128xf32> to vector<32x128xf32>
    %58 = arith.mulf %55, %57 : vector<32x128xf32>
    %c43 = arith.constant 43 : index
    %c0_26 = arith.constant 0 : index
    %59 = vector.load %arg1[%c43, %c0_26] : memref<224x128xf32, #tpu.memory_space<vmem>>, vector<1x128xf32>
    %60 = vector.broadcast %59 : vector<1x128xf32> to vector<32x128xf32>
    %61 = arith.mulf %46, %60 : vector<32x128xf32>
    %62 = tpu.concatenate %50, %54, %58, %61 in 0 : vector<32x128xf32>, vector<32x128xf32>, vector<32x128xf32>, vector<32x128xf32> -> vector<128x128xf32>
    %c128 = arith.constant 128 : index
    %c0_27 = arith.constant 0 : index
    %63 = vector.load %arg1[%c128, %c0_27] : memref<224x128xf32, #tpu.memory_space<vmem>>, vector<32x128xf32>
    %c0_28 = arith.constant 0 : index
    %c2 = arith.constant 2 : index
    %64 = vector.load %arg1[%c0_28, %c2] : memref<224x128xf32, #tpu.memory_space<vmem>>, vector<32x1xf32>
    %cst_29 = arith.constant dense<0.000000e+00> : vector<32x128xf32>
    %65 = tpu.matmul %63, %62, %cst_29 {dimension_numbers = #tpu.dot_dimension_numbers<[1], [0], [0], [1], [0, 0, 1, 1], [], []>} : vector<32x128xf32>, vector<128x128xf32>, vector<32x128xf32> -> vector<32x128xf32>
    %66 = vector.broadcast %64 : vector<32x1xf32> to vector<32x128xf32>
    %67 = arith.addf %65, %66 : vector<32x128xf32>
    %cst_30 = arith.constant 0.000000e+00 : f32
    %68 = vector.broadcast %cst_30 : f32 to vector<32x128xf32>
    %69 = arith.maximumf %67, %68 : vector<32x128xf32>
    %c12_i32_31 = arith.constant 12 : i32
    %70 = tpu.dynamic_rotate %69 by %c12_i32_31 dim 1 : vector<32x128xf32>, i32 -> vector<32x128xf32>
    %c44 = arith.constant 44 : index
    %c0_32 = arith.constant 0 : index
    %71 = vector.load %arg1[%c44, %c0_32] : memref<224x128xf32, #tpu.memory_space<vmem>>, vector<1x128xf32>
    %72 = vector.broadcast %71 : vector<1x128xf32> to vector<32x128xf32>
    %73 = arith.mulf %70, %72 : vector<32x128xf32>
    %c11_i32_33 = arith.constant 11 : i32
    %74 = tpu.dynamic_rotate %69 by %c11_i32_33 dim 1 : vector<32x128xf32>, i32 -> vector<32x128xf32>
    %c45 = arith.constant 45 : index
    %c0_34 = arith.constant 0 : index
    %75 = vector.load %arg1[%c45, %c0_34] : memref<224x128xf32, #tpu.memory_space<vmem>>, vector<1x128xf32>
    %76 = vector.broadcast %75 : vector<1x128xf32> to vector<32x128xf32>
    %77 = arith.mulf %74, %76 : vector<32x128xf32>
    %c1_i32_35 = arith.constant 1 : i32
    %78 = tpu.dynamic_rotate %69 by %c1_i32_35 dim 1 : vector<32x128xf32>, i32 -> vector<32x128xf32>
    %c46 = arith.constant 46 : index
    %c0_36 = arith.constant 0 : index
    %79 = vector.load %arg1[%c46, %c0_36] : memref<224x128xf32, #tpu.memory_space<vmem>>, vector<1x128xf32>
    %80 = vector.broadcast %79 : vector<1x128xf32> to vector<32x128xf32>
    %81 = arith.mulf %78, %80 : vector<32x128xf32>
    %c47 = arith.constant 47 : index
    %c0_37 = arith.constant 0 : index
    %82 = vector.load %arg1[%c47, %c0_37] : memref<224x128xf32, #tpu.memory_space<vmem>>, vector<1x128xf32>
    %83 = vector.broadcast %82 : vector<1x128xf32> to vector<32x128xf32>
    %84 = arith.mulf %69, %83 : vector<32x128xf32>
    %85 = tpu.concatenate %73, %77, %81, %84 in 0 : vector<32x128xf32>, vector<32x128xf32>, vector<32x128xf32>, vector<32x128xf32> -> vector<128x128xf32>
    %c160 = arith.constant 160 : index
    %c0_38 = arith.constant 0 : index
    %86 = vector.load %arg1[%c160, %c0_38] : memref<224x128xf32, #tpu.memory_space<vmem>>, vector<32x128xf32>
    %c0_39 = arith.constant 0 : index
    %c3 = arith.constant 3 : index
    %87 = vector.load %arg1[%c0_39, %c3] : memref<224x128xf32, #tpu.memory_space<vmem>>, vector<32x1xf32>
    %cst_40 = arith.constant dense<0.000000e+00> : vector<32x128xf32>
    %88 = tpu.matmul %86, %85, %cst_40 {dimension_numbers = #tpu.dot_dimension_numbers<[1], [0], [0], [1], [0, 0, 1, 1], [], []>} : vector<32x128xf32>, vector<128x128xf32>, vector<32x128xf32> -> vector<32x128xf32>
    %89 = vector.broadcast %87 : vector<32x1xf32> to vector<32x128xf32>
    %90 = arith.addf %88, %89 : vector<32x128xf32>
    %cst_41 = arith.constant 0.000000e+00 : f32
    %91 = vector.broadcast %cst_41 : f32 to vector<32x128xf32>
    %92 = arith.maximumf %90, %91 : vector<32x128xf32>
    %c12_i32_42 = arith.constant 12 : i32
    %93 = tpu.dynamic_rotate %92 by %c12_i32_42 dim 1 : vector<32x128xf32>, i32 -> vector<32x128xf32>
    %c48 = arith.constant 48 : index
    %c0_43 = arith.constant 0 : index
    %94 = vector.load %arg1[%c48, %c0_43] : memref<224x128xf32, #tpu.memory_space<vmem>>, vector<1x128xf32>
    %95 = vector.broadcast %94 : vector<1x128xf32> to vector<32x128xf32>
    %96 = arith.mulf %93, %95 : vector<32x128xf32>
    %c11_i32_44 = arith.constant 11 : i32
    %97 = tpu.dynamic_rotate %92 by %c11_i32_44 dim 1 : vector<32x128xf32>, i32 -> vector<32x128xf32>
    %c49 = arith.constant 49 : index
    %c0_45 = arith.constant 0 : index
    %98 = vector.load %arg1[%c49, %c0_45] : memref<224x128xf32, #tpu.memory_space<vmem>>, vector<1x128xf32>
    %99 = vector.broadcast %98 : vector<1x128xf32> to vector<32x128xf32>
    %100 = arith.mulf %97, %99 : vector<32x128xf32>
    %c1_i32_46 = arith.constant 1 : i32
    %101 = tpu.dynamic_rotate %92 by %c1_i32_46 dim 1 : vector<32x128xf32>, i32 -> vector<32x128xf32>
    %c50 = arith.constant 50 : index
    %c0_47 = arith.constant 0 : index
    %102 = vector.load %arg1[%c50, %c0_47] : memref<224x128xf32, #tpu.memory_space<vmem>>, vector<1x128xf32>
    %103 = vector.broadcast %102 : vector<1x128xf32> to vector<32x128xf32>
    %104 = arith.mulf %101, %103 : vector<32x128xf32>
    %c51 = arith.constant 51 : index
    %c0_48 = arith.constant 0 : index
    %105 = vector.load %arg1[%c51, %c0_48] : memref<224x128xf32, #tpu.memory_space<vmem>>, vector<1x128xf32>
    %106 = vector.broadcast %105 : vector<1x128xf32> to vector<32x128xf32>
    %107 = arith.mulf %92, %106 : vector<32x128xf32>
    %108 = tpu.concatenate %96, %100, %104, %107 in 0 : vector<32x128xf32>, vector<32x128xf32>, vector<32x128xf32>, vector<32x128xf32> -> vector<128x128xf32>
    %c192 = arith.constant 192 : index
    %c0_49 = arith.constant 0 : index
    %109 = vector.load %arg1[%c192, %c0_49] : memref<224x128xf32, #tpu.memory_space<vmem>>, vector<32x128xf32>
    %c0_50 = arith.constant 0 : index
    %c4 = arith.constant 4 : index
    %110 = vector.load %arg1[%c0_50, %c4] : memref<224x128xf32, #tpu.memory_space<vmem>>, vector<32x1xf32>
    %cst_51 = arith.constant dense<0.000000e+00> : vector<32x128xf32>
    %111 = tpu.matmul %109, %108, %cst_51 {dimension_numbers = #tpu.dot_dimension_numbers<[1], [0], [0], [1], [0, 0, 1, 1], [], []>} : vector<32x128xf32>, vector<128x128xf32>, vector<32x128xf32> -> vector<32x128xf32>
    %112 = vector.broadcast %110 : vector<32x1xf32> to vector<32x128xf32>
    %113 = arith.addf %111, %112 : vector<32x128xf32>
    %cst_52 = arith.constant 0.000000e+00 : f32
    %114 = vector.broadcast %cst_52 : f32 to vector<32x128xf32>
    %115 = arith.maximumf %113, %114 : vector<32x128xf32>
    %cst_53 = arith.constant 0.000000e+00 : f32
    %116 = vector.broadcast %cst_53 : f32 to vector<32x128xf32>
    %c0_54 = arith.constant 0 : index
    %c0_55 = arith.constant 0 : index
    %117 = vector.load %arg2[%c0_54, %c0_55] : memref<1024x128xbf16, #tpu.memory_space<vmem>>, vector<32x128xbf16>
    %118 = arith.extf %117 : vector<32x128xbf16> to vector<32x128xf32>
    %119 = vector.extract_strided_slice %115 {offsets = [0, 0], sizes = [1, 128], strides = [1, 1]} : vector<32x128xf32> to vector<1x128xf32>
    %120 = vector.broadcast %119 : vector<1x128xf32> to vector<32x128xf32>
    %121 = arith.mulf %118, %120 : vector<32x128xf32>
    %122 = arith.addf %116, %121 : vector<32x128xf32>
    %c32_56 = arith.constant 32 : index
    %c0_57 = arith.constant 0 : index
    %123 = vector.load %arg2[%c32_56, %c0_57] : memref<1024x128xbf16, #tpu.memory_space<vmem>>, vector<32x128xbf16>
    %124 = arith.extf %123 : vector<32x128xbf16> to vector<32x128xf32>
    %125 = vector.extract_strided_slice %115 {offsets = [1, 0], sizes = [1, 128], strides = [1, 1]} : vector<32x128xf32> to vector<1x128xf32>
    %126 = vector.broadcast %125 : vector<1x128xf32> to vector<32x128xf32>
    %127 = arith.mulf %124, %126 : vector<32x128xf32>
    %128 = arith.addf %122, %127 : vector<32x128xf32>
    %c64_58 = arith.constant 64 : index
    %c0_59 = arith.constant 0 : index
    %129 = vector.load %arg2[%c64_58, %c0_59] : memref<1024x128xbf16, #tpu.memory_space<vmem>>, vector<32x128xbf16>
    %130 = arith.extf %129 : vector<32x128xbf16> to vector<32x128xf32>
    %131 = vector.extract_strided_slice %115 {offsets = [2, 0], sizes = [1, 128], strides = [1, 1]} : vector<32x128xf32> to vector<1x128xf32>
    %132 = vector.broadcast %131 : vector<1x128xf32> to vector<32x128xf32>
    %133 = arith.mulf %130, %132 : vector<32x128xf32>
    %134 = arith.addf %128, %133 : vector<32x128xf32>
    %c96_60 = arith.constant 96 : index
    %c0_61 = arith.constant 0 : index
    %135 = vector.load %arg2[%c96_60, %c0_61] : memref<1024x128xbf16, #tpu.memory_space<vmem>>, vector<32x128xbf16>
    %136 = arith.extf %135 : vector<32x128xbf16> to vector<32x128xf32>
    %137 = vector.extract_strided_slice %115 {offsets = [3, 0], sizes = [1, 128], strides = [1, 1]} : vector<32x128xf32> to vector<1x128xf32>
    %138 = vector.broadcast %137 : vector<1x128xf32> to vector<32x128xf32>
    %139 = arith.mulf %136, %138 : vector<32x128xf32>
    %140 = arith.addf %134, %139 : vector<32x128xf32>
    %c128_62 = arith.constant 128 : index
    %c0_63 = arith.constant 0 : index
    %141 = vector.load %arg2[%c128_62, %c0_63] : memref<1024x128xbf16, #tpu.memory_space<vmem>>, vector<32x128xbf16>
    %142 = arith.extf %141 : vector<32x128xbf16> to vector<32x128xf32>
    %143 = vector.extract_strided_slice %115 {offsets = [4, 0], sizes = [1, 128], strides = [1, 1]} : vector<32x128xf32> to vector<1x128xf32>
    %144 = vector.broadcast %143 : vector<1x128xf32> to vector<32x128xf32>
    %145 = arith.mulf %142, %144 : vector<32x128xf32>
    %146 = arith.addf %140, %145 : vector<32x128xf32>
    %c160_64 = arith.constant 160 : index
    %c0_65 = arith.constant 0 : index
    %147 = vector.load %arg2[%c160_64, %c0_65] : memref<1024x128xbf16, #tpu.memory_space<vmem>>, vector<32x128xbf16>
    %148 = arith.extf %147 : vector<32x128xbf16> to vector<32x128xf32>
    %149 = vector.extract_strided_slice %115 {offsets = [5, 0], sizes = [1, 128], strides = [1, 1]} : vector<32x128xf32> to vector<1x128xf32>
    %150 = vector.broadcast %149 : vector<1x128xf32> to vector<32x128xf32>
    %151 = arith.mulf %148, %150 : vector<32x128xf32>
    %152 = arith.addf %146, %151 : vector<32x128xf32>
    %c192_66 = arith.constant 192 : index
    %c0_67 = arith.constant 0 : index
    %153 = vector.load %arg2[%c192_66, %c0_67] : memref<1024x128xbf16, #tpu.memory_space<vmem>>, vector<32x128xbf16>
    %154 = arith.extf %153 : vector<32x128xbf16> to vector<32x128xf32>
    %155 = vector.extract_strided_slice %115 {offsets = [6, 0], sizes = [1, 128], strides = [1, 1]} : vector<32x128xf32> to vector<1x128xf32>
    %156 = vector.broadcast %155 : vector<1x128xf32> to vector<32x128xf32>
    %157 = arith.mulf %154, %156 : vector<32x128xf32>
    %158 = arith.addf %152, %157 : vector<32x128xf32>
    %c224 = arith.constant 224 : index
    %c0_68 = arith.constant 0 : index
    %159 = vector.load %arg2[%c224, %c0_68] : memref<1024x128xbf16, #tpu.memory_space<vmem>>, vector<32x128xbf16>
    %160 = arith.extf %159 : vector<32x128xbf16> to vector<32x128xf32>
    %161 = vector.extract_strided_slice %115 {offsets = [7, 0], sizes = [1, 128], strides = [1, 1]} : vector<32x128xf32> to vector<1x128xf32>
    %162 = vector.broadcast %161 : vector<1x128xf32> to vector<32x128xf32>
    %163 = arith.mulf %160, %162 : vector<32x128xf32>
    %164 = arith.addf %158, %163 : vector<32x128xf32>
    %c256 = arith.constant 256 : index
    %c0_69 = arith.constant 0 : index
    %165 = vector.load %arg2[%c256, %c0_69] : memref<1024x128xbf16, #tpu.memory_space<vmem>>, vector<32x128xbf16>
    %166 = arith.extf %165 : vector<32x128xbf16> to vector<32x128xf32>
    %167 = vector.extract_strided_slice %115 {offsets = [8, 0], sizes = [1, 128], strides = [1, 1]} : vector<32x128xf32> to vector<1x128xf32>
    %168 = vector.broadcast %167 : vector<1x128xf32> to vector<32x128xf32>
    %169 = arith.mulf %166, %168 : vector<32x128xf32>
    %170 = arith.addf %164, %169 : vector<32x128xf32>
    %c288 = arith.constant 288 : index
    %c0_70 = arith.constant 0 : index
    %171 = vector.load %arg2[%c288, %c0_70] : memref<1024x128xbf16, #tpu.memory_space<vmem>>, vector<32x128xbf16>
    %172 = arith.extf %171 : vector<32x128xbf16> to vector<32x128xf32>
    %173 = vector.extract_strided_slice %115 {offsets = [9, 0], sizes = [1, 128], strides = [1, 1]} : vector<32x128xf32> to vector<1x128xf32>
    %174 = vector.broadcast %173 : vector<1x128xf32> to vector<32x128xf32>
    %175 = arith.mulf %172, %174 : vector<32x128xf32>
    %176 = arith.addf %170, %175 : vector<32x128xf32>
    %c320 = arith.constant 320 : index
    %c0_71 = arith.constant 0 : index
    %177 = vector.load %arg2[%c320, %c0_71] : memref<1024x128xbf16, #tpu.memory_space<vmem>>, vector<32x128xbf16>
    %178 = arith.extf %177 : vector<32x128xbf16> to vector<32x128xf32>
    %179 = vector.extract_strided_slice %115 {offsets = [10, 0], sizes = [1, 128], strides = [1, 1]} : vector<32x128xf32> to vector<1x128xf32>
    %180 = vector.broadcast %179 : vector<1x128xf32> to vector<32x128xf32>
    %181 = arith.mulf %178, %180 : vector<32x128xf32>
    %182 = arith.addf %176, %181 : vector<32x128xf32>
    %c352 = arith.constant 352 : index
    %c0_72 = arith.constant 0 : index
    %183 = vector.load %arg2[%c352, %c0_72] : memref<1024x128xbf16, #tpu.memory_space<vmem>>, vector<32x128xbf16>
    %184 = arith.extf %183 : vector<32x128xbf16> to vector<32x128xf32>
    %185 = vector.extract_strided_slice %115 {offsets = [11, 0], sizes = [1, 128], strides = [1, 1]} : vector<32x128xf32> to vector<1x128xf32>
    %186 = vector.broadcast %185 : vector<1x128xf32> to vector<32x128xf32>
    %187 = arith.mulf %184, %186 : vector<32x128xf32>
    %188 = arith.addf %182, %187 : vector<32x128xf32>
    %c384 = arith.constant 384 : index
    %c0_73 = arith.constant 0 : index
    %189 = vector.load %arg2[%c384, %c0_73] : memref<1024x128xbf16, #tpu.memory_space<vmem>>, vector<32x128xbf16>
    %190 = arith.extf %189 : vector<32x128xbf16> to vector<32x128xf32>
    %191 = vector.extract_strided_slice %115 {offsets = [12, 0], sizes = [1, 128], strides = [1, 1]} : vector<32x128xf32> to vector<1x128xf32>
    %192 = vector.broadcast %191 : vector<1x128xf32> to vector<32x128xf32>
    %193 = arith.mulf %190, %192 : vector<32x128xf32>
    %194 = arith.addf %188, %193 : vector<32x128xf32>
    %c416 = arith.constant 416 : index
    %c0_74 = arith.constant 0 : index
    %195 = vector.load %arg2[%c416, %c0_74] : memref<1024x128xbf16, #tpu.memory_space<vmem>>, vector<32x128xbf16>
    %196 = arith.extf %195 : vector<32x128xbf16> to vector<32x128xf32>
    %197 = vector.extract_strided_slice %115 {offsets = [13, 0], sizes = [1, 128], strides = [1, 1]} : vector<32x128xf32> to vector<1x128xf32>
    %198 = vector.broadcast %197 : vector<1x128xf32> to vector<32x128xf32>
    %199 = arith.mulf %196, %198 : vector<32x128xf32>
    %200 = arith.addf %194, %199 : vector<32x128xf32>
    %c448 = arith.constant 448 : index
    %c0_75 = arith.constant 0 : index
    %201 = vector.load %arg2[%c448, %c0_75] : memref<1024x128xbf16, #tpu.memory_space<vmem>>, vector<32x128xbf16>
    %202 = arith.extf %201 : vector<32x128xbf16> to vector<32x128xf32>
    %203 = vector.extract_strided_slice %115 {offsets = [14, 0], sizes = [1, 128], strides = [1, 1]} : vector<32x128xf32> to vector<1x128xf32>
    %204 = vector.broadcast %203 : vector<1x128xf32> to vector<32x128xf32>
    %205 = arith.mulf %202, %204 : vector<32x128xf32>
    %206 = arith.addf %200, %205 : vector<32x128xf32>
    %c480 = arith.constant 480 : index
    %c0_76 = arith.constant 0 : index
    %207 = vector.load %arg2[%c480, %c0_76] : memref<1024x128xbf16, #tpu.memory_space<vmem>>, vector<32x128xbf16>
    %208 = arith.extf %207 : vector<32x128xbf16> to vector<32x128xf32>
    %209 = vector.extract_strided_slice %115 {offsets = [15, 0], sizes = [1, 128], strides = [1, 1]} : vector<32x128xf32> to vector<1x128xf32>
    %210 = vector.broadcast %209 : vector<1x128xf32> to vector<32x128xf32>
    %211 = arith.mulf %208, %210 : vector<32x128xf32>
    %212 = arith.addf %206, %211 : vector<32x128xf32>
    %c512 = arith.constant 512 : index
    %c0_77 = arith.constant 0 : index
    %213 = vector.load %arg2[%c512, %c0_77] : memref<1024x128xbf16, #tpu.memory_space<vmem>>, vector<32x128xbf16>
    %214 = arith.extf %213 : vector<32x128xbf16> to vector<32x128xf32>
    %215 = vector.extract_strided_slice %115 {offsets = [16, 0], sizes = [1, 128], strides = [1, 1]} : vector<32x128xf32> to vector<1x128xf32>
    %216 = vector.broadcast %215 : vector<1x128xf32> to vector<32x128xf32>
    %217 = arith.mulf %214, %216 : vector<32x128xf32>
    %218 = arith.addf %212, %217 : vector<32x128xf32>
    %c544 = arith.constant 544 : index
    %c0_78 = arith.constant 0 : index
    %219 = vector.load %arg2[%c544, %c0_78] : memref<1024x128xbf16, #tpu.memory_space<vmem>>, vector<32x128xbf16>
    %220 = arith.extf %219 : vector<32x128xbf16> to vector<32x128xf32>
    %221 = vector.extract_strided_slice %115 {offsets = [17, 0], sizes = [1, 128], strides = [1, 1]} : vector<32x128xf32> to vector<1x128xf32>
    %222 = vector.broadcast %221 : vector<1x128xf32> to vector<32x128xf32>
    %223 = arith.mulf %220, %222 : vector<32x128xf32>
    %224 = arith.addf %218, %223 : vector<32x128xf32>
    %c576 = arith.constant 576 : index
    %c0_79 = arith.constant 0 : index
    %225 = vector.load %arg2[%c576, %c0_79] : memref<1024x128xbf16, #tpu.memory_space<vmem>>, vector<32x128xbf16>
    %226 = arith.extf %225 : vector<32x128xbf16> to vector<32x128xf32>
    %227 = vector.extract_strided_slice %115 {offsets = [18, 0], sizes = [1, 128], strides = [1, 1]} : vector<32x128xf32> to vector<1x128xf32>
    %228 = vector.broadcast %227 : vector<1x128xf32> to vector<32x128xf32>
    %229 = arith.mulf %226, %228 : vector<32x128xf32>
    %230 = arith.addf %224, %229 : vector<32x128xf32>
    %c608 = arith.constant 608 : index
    %c0_80 = arith.constant 0 : index
    %231 = vector.load %arg2[%c608, %c0_80] : memref<1024x128xbf16, #tpu.memory_space<vmem>>, vector<32x128xbf16>
    %232 = arith.extf %231 : vector<32x128xbf16> to vector<32x128xf32>
    %233 = vector.extract_strided_slice %115 {offsets = [19, 0], sizes = [1, 128], strides = [1, 1]} : vector<32x128xf32> to vector<1x128xf32>
    %234 = vector.broadcast %233 : vector<1x128xf32> to vector<32x128xf32>
    %235 = arith.mulf %232, %234 : vector<32x128xf32>
    %236 = arith.addf %230, %235 : vector<32x128xf32>
    %c640 = arith.constant 640 : index
    %c0_81 = arith.constant 0 : index
    %237 = vector.load %arg2[%c640, %c0_81] : memref<1024x128xbf16, #tpu.memory_space<vmem>>, vector<32x128xbf16>
    %238 = arith.extf %237 : vector<32x128xbf16> to vector<32x128xf32>
    %239 = vector.extract_strided_slice %115 {offsets = [20, 0], sizes = [1, 128], strides = [1, 1]} : vector<32x128xf32> to vector<1x128xf32>
    %240 = vector.broadcast %239 : vector<1x128xf32> to vector<32x128xf32>
    %241 = arith.mulf %238, %240 : vector<32x128xf32>
    %242 = arith.addf %236, %241 : vector<32x128xf32>
    %c672 = arith.constant 672 : index
    %c0_82 = arith.constant 0 : index
    %243 = vector.load %arg2[%c672, %c0_82] : memref<1024x128xbf16, #tpu.memory_space<vmem>>, vector<32x128xbf16>
    %244 = arith.extf %243 : vector<32x128xbf16> to vector<32x128xf32>
    %245 = vector.extract_strided_slice %115 {offsets = [21, 0], sizes = [1, 128], strides = [1, 1]} : vector<32x128xf32> to vector<1x128xf32>
    %246 = vector.broadcast %245 : vector<1x128xf32> to vector<32x128xf32>
    %247 = arith.mulf %244, %246 : vector<32x128xf32>
    %248 = arith.addf %242, %247 : vector<32x128xf32>
    %c704 = arith.constant 704 : index
    %c0_83 = arith.constant 0 : index
    %249 = vector.load %arg2[%c704, %c0_83] : memref<1024x128xbf16, #tpu.memory_space<vmem>>, vector<32x128xbf16>
    %250 = arith.extf %249 : vector<32x128xbf16> to vector<32x128xf32>
    %251 = vector.extract_strided_slice %115 {offsets = [22, 0], sizes = [1, 128], strides = [1, 1]} : vector<32x128xf32> to vector<1x128xf32>
    %252 = vector.broadcast %251 : vector<1x128xf32> to vector<32x128xf32>
    %253 = arith.mulf %250, %252 : vector<32x128xf32>
    %254 = arith.addf %248, %253 : vector<32x128xf32>
    %c736 = arith.constant 736 : index
    %c0_84 = arith.constant 0 : index
    %255 = vector.load %arg2[%c736, %c0_84] : memref<1024x128xbf16, #tpu.memory_space<vmem>>, vector<32x128xbf16>
    %256 = arith.extf %255 : vector<32x128xbf16> to vector<32x128xf32>
    %257 = vector.extract_strided_slice %115 {offsets = [23, 0], sizes = [1, 128], strides = [1, 1]} : vector<32x128xf32> to vector<1x128xf32>
    %258 = vector.broadcast %257 : vector<1x128xf32> to vector<32x128xf32>
    %259 = arith.mulf %256, %258 : vector<32x128xf32>
    %260 = arith.addf %254, %259 : vector<32x128xf32>
    %c768 = arith.constant 768 : index
    %c0_85 = arith.constant 0 : index
    %261 = vector.load %arg2[%c768, %c0_85] : memref<1024x128xbf16, #tpu.memory_space<vmem>>, vector<32x128xbf16>
    %262 = arith.extf %261 : vector<32x128xbf16> to vector<32x128xf32>
    %263 = vector.extract_strided_slice %115 {offsets = [24, 0], sizes = [1, 128], strides = [1, 1]} : vector<32x128xf32> to vector<1x128xf32>
    %264 = vector.broadcast %263 : vector<1x128xf32> to vector<32x128xf32>
    %265 = arith.mulf %262, %264 : vector<32x128xf32>
    %266 = arith.addf %260, %265 : vector<32x128xf32>
    %c800 = arith.constant 800 : index
    %c0_86 = arith.constant 0 : index
    %267 = vector.load %arg2[%c800, %c0_86] : memref<1024x128xbf16, #tpu.memory_space<vmem>>, vector<32x128xbf16>
    %268 = arith.extf %267 : vector<32x128xbf16> to vector<32x128xf32>
    %269 = vector.extract_strided_slice %115 {offsets = [25, 0], sizes = [1, 128], strides = [1, 1]} : vector<32x128xf32> to vector<1x128xf32>
    %270 = vector.broadcast %269 : vector<1x128xf32> to vector<32x128xf32>
    %271 = arith.mulf %268, %270 : vector<32x128xf32>
    %272 = arith.addf %266, %271 : vector<32x128xf32>
    %c832 = arith.constant 832 : index
    %c0_87 = arith.constant 0 : index
    %273 = vector.load %arg2[%c832, %c0_87] : memref<1024x128xbf16, #tpu.memory_space<vmem>>, vector<32x128xbf16>
    %274 = arith.extf %273 : vector<32x128xbf16> to vector<32x128xf32>
    %275 = vector.extract_strided_slice %115 {offsets = [26, 0], sizes = [1, 128], strides = [1, 1]} : vector<32x128xf32> to vector<1x128xf32>
    %276 = vector.broadcast %275 : vector<1x128xf32> to vector<32x128xf32>
    %277 = arith.mulf %274, %276 : vector<32x128xf32>
    %278 = arith.addf %272, %277 : vector<32x128xf32>
    %c864 = arith.constant 864 : index
    %c0_88 = arith.constant 0 : index
    %279 = vector.load %arg2[%c864, %c0_88] : memref<1024x128xbf16, #tpu.memory_space<vmem>>, vector<32x128xbf16>
    %280 = arith.extf %279 : vector<32x128xbf16> to vector<32x128xf32>
    %281 = vector.extract_strided_slice %115 {offsets = [27, 0], sizes = [1, 128], strides = [1, 1]} : vector<32x128xf32> to vector<1x128xf32>
    %282 = vector.broadcast %281 : vector<1x128xf32> to vector<32x128xf32>
    %283 = arith.mulf %280, %282 : vector<32x128xf32>
    %284 = arith.addf %278, %283 : vector<32x128xf32>
    %c896 = arith.constant 896 : index
    %c0_89 = arith.constant 0 : index
    %285 = vector.load %arg2[%c896, %c0_89] : memref<1024x128xbf16, #tpu.memory_space<vmem>>, vector<32x128xbf16>
    %286 = arith.extf %285 : vector<32x128xbf16> to vector<32x128xf32>
    %287 = vector.extract_strided_slice %115 {offsets = [28, 0], sizes = [1, 128], strides = [1, 1]} : vector<32x128xf32> to vector<1x128xf32>
    %288 = vector.broadcast %287 : vector<1x128xf32> to vector<32x128xf32>
    %289 = arith.mulf %286, %288 : vector<32x128xf32>
    %290 = arith.addf %284, %289 : vector<32x128xf32>
    %c928 = arith.constant 928 : index
    %c0_90 = arith.constant 0 : index
    %291 = vector.load %arg2[%c928, %c0_90] : memref<1024x128xbf16, #tpu.memory_space<vmem>>, vector<32x128xbf16>
    %292 = arith.extf %291 : vector<32x128xbf16> to vector<32x128xf32>
    %293 = vector.extract_strided_slice %115 {offsets = [29, 0], sizes = [1, 128], strides = [1, 1]} : vector<32x128xf32> to vector<1x128xf32>
    %294 = vector.broadcast %293 : vector<1x128xf32> to vector<32x128xf32>
    %295 = arith.mulf %292, %294 : vector<32x128xf32>
    %296 = arith.addf %290, %295 : vector<32x128xf32>
    %c960 = arith.constant 960 : index
    %c0_91 = arith.constant 0 : index
    %297 = vector.load %arg2[%c960, %c0_91] : memref<1024x128xbf16, #tpu.memory_space<vmem>>, vector<32x128xbf16>
    %298 = arith.extf %297 : vector<32x128xbf16> to vector<32x128xf32>
    %299 = vector.extract_strided_slice %115 {offsets = [30, 0], sizes = [1, 128], strides = [1, 1]} : vector<32x128xf32> to vector<1x128xf32>
    %300 = vector.broadcast %299 : vector<1x128xf32> to vector<32x128xf32>
    %301 = arith.mulf %298, %300 : vector<32x128xf32>
    %302 = arith.addf %296, %301 : vector<32x128xf32>
    %c992 = arith.constant 992 : index
    %c0_92 = arith.constant 0 : index
    %303 = vector.load %arg2[%c992, %c0_92] : memref<1024x128xbf16, #tpu.memory_space<vmem>>, vector<32x128xbf16>
    %304 = arith.extf %303 : vector<32x128xbf16> to vector<32x128xf32>
    %305 = vector.extract_strided_slice %115 {offsets = [31, 0], sizes = [1, 128], strides = [1, 1]} : vector<32x128xf32> to vector<1x128xf32>
    %306 = vector.broadcast %305 : vector<1x128xf32> to vector<32x128xf32>
    %307 = arith.mulf %304, %306 : vector<32x128xf32>
    %308 = arith.addf %302, %307 : vector<32x128xf32>
    %cst_93 = arith.constant dense<0.000000e+00> : vector<32xf32>
    %309 = vector.multi_reduction <add>, %308, %cst_93 [1] : vector<32x128xf32> to vector<32xf32>
    %310 = vector.shape_cast %309 : vector<32xf32> to vector<32x1xf32>
    %c0_94 = arith.constant 0 : index
    %c5 = arith.constant 5 : index
    %311 = vector.load %arg1[%c0_94, %c5] : memref<224x128xf32, #tpu.memory_space<vmem>>, vector<32x1xf32>
    %312 = arith.addf %310, %311 : vector<32x1xf32>
    %cst_95 = arith.constant 0.000000e+00 : f32
    %313 = vector.broadcast %cst_95 : f32 to vector<32x1xf32>
    %314 = arith.maximumf %312, %313 : vector<32x1xf32>
    %c0_96 = arith.constant 0 : index
    %c8 = arith.constant 8 : index
    %315 = vector.load %arg1[%c0_96, %c8] : memref<224x128xf32, #tpu.memory_space<vmem>>, vector<32x8xf32>
    %c0_97 = arith.constant 0 : index
    %c16 = arith.constant 16 : index
    %316 = vector.load %arg1[%c0_97, %c16] : memref<224x128xf32, #tpu.memory_space<vmem>>, vector<1x8xf32>
    %317 = vector.broadcast %314 : vector<32x1xf32> to vector<32x8xf32>
    %318 = arith.mulf %315, %317 : vector<32x8xf32>
    %cst_98 = arith.constant dense<0.000000e+00> : vector<8xf32>
    %319 = vector.multi_reduction <add>, %318, %cst_98 [0] : vector<32x8xf32> to vector<8xf32>
    %320 = vector.shape_cast %319 : vector<8xf32> to vector<1x8xf32>
    %321 = arith.addf %320, %316 : vector<1x8xf32>
    %c0_99 = arith.constant 0 : index
    %c0_100 = arith.constant 0 : index
    %322 = vector.load %arg3[%c0_99, %c0_100] : memref<1x8xf32, #tpu.memory_space<vmem>>, vector<1x8xf32>
    tpu.vector_store %arg3[%c0_99, %c0_100], %321 {strides = array<i32>} : memref<1x8xf32, #tpu.memory_space<vmem>>, vector<1x8xf32>,
    return
  }
}

</mosaic_0001>

<llo_original>
// kernel: model_forward.1
$region0: #{model_forward.1}
  #allocation0 [shape = 'u32[]', space=smem, size = 0x4, offset = 0x4, fixed_abs, tag = 'smem constant byte address 0x4 - core index']
  #allocation1 [shape = 'u32[72,128]{1,0:T(1,128)}', space=vmem, size = 0x9000, scoped, tag = 'internal scratch']
  %s0 = inlined_call_operand.vmem [shape: f32[32,128], index: 0, kind: input, shape index: {}]
  %s1 = inlined_call_operand.vmem [shape: f32[224,128], index: 1, kind: input, shape index: {}]
  %s2 = inlined_call_operand.hbm [shape: bf16[1024,128], index: 2, kind: input, shape index: {}]
  %s3 = inlined_call_operand.vmem [shape: f32[1,8], index: 3, kind: output, shape index: {}]
  %s4 = sld [smem:[#allocation0]]
  $region26: #{model_forward.1} parent=0
    _
  %s6 = ssub.s32 1, %s4
  %s7 = scalar_select 0, %s6, %s4
  $region1: #{model_forward.1} parent=0
    #allocation2 [shape = 'u8[262144]{0}', space=vmem, size = 0x40000, scoped, tag = 'input window, operand 2, single buffered']
    #allocation3 [shape = 's32[1]{0}', space=sflag, size = 0x4, scoped, tag = 'scoped memory for model_forward.1']
    %8 = vsyncpa [#allocation3], 0
    // Predicated region
    $region2: #{model_forward.1} parent=1 // pred_check
      _
    $region3: #{model_forward.1} parent=1 // pred_check_branch
      %10 = sbr.rel (0) target = $region5
    $region4: #{model_forward.1} parent=1 // pred_region
      _
    $region5: #{model_forward.1} parent=1 // pred_fallthru
      _
    // Predicated region
    $region6: #{model_forward.1} parent=1 // pred_check
      _
    $region7: #{model_forward.1} parent=1 // pred_check_branch
      %12 = sbr.rel (0) target = $region9
    $region8: #{model_forward.1} parent=1 // pred_region
      _
    $region9: #{model_forward.1} parent=1 // pred_fallthru
      _
    // Predicated region
    $region10: #{model_forward.1} parent=1 // pred_check
      _
    $region11: #{model_forward.1} parent=1 // pred_check_branch
      %14 = sbr.rel (0) target = $region13
    $region12: #{model_forward.1} parent=1 // pred_region
      %16 = vsyncadd [#allocation3], 0
      %s17 = sshll.u32 %s2, 4
      %s18 = int_to_ptr.hbm [resolvable:$true] %s17
      %s19 = sshll.u32 [#allocation2], 4
      %s20 = int_to_ptr.vmem [resolvable:$true] %s19
      %25 = dma.hbm_to_vmem [thread:$0]  %s18, 8192, %s20, [#allocation3], 64, 64, 4
    $region13: #{model_forward.1} parent=1 // pred_fallthru
      _
    // Predicated region
    $region14: #{model_forward.1} parent=1 // pred_check
      _
    $region15: #{model_forward.1} parent=1 // pred_check_branch
      %27 = sbr.rel (0) target = $region17
    $region16: #{model_forward.1} parent=1 // pred_region
      %29 = dma.done [#allocation3], 8192
    $region17: #{model_forward.1} parent=1 // pred_fallthru
      _
    %v30 = vld [vmem:[%s0] sm:$0xff]
    %v31 = vld [vmem:[%s0 + $0x8] sm:$0xff]
    %v32 = vld [vmem:[%s0 + $0x10] sm:$0xff]
    %v33 = vld [vmem:[%s0 + $0x18] sm:$0xff]
    %34 = vrot.lane.b32.xlu0 %v30, 12
    %v35 = vpop.permute.xlu0 %34
    %36 = vrot.lane.b32.xlu0 %v31, 12
    %v37 = vpop.permute.xlu0 %36
    %38 = vrot.lane.b32.xlu0 %v32, 12
    %v39 = vpop.permute.xlu0 %38
    %40 = vrot.lane.b32.xlu0 %v33, 12
    %v41 = vpop.permute.xlu0 %40
    %v42 = vld [vmem:[%s1 + $0x20] sm:$0x1]
    %v43 = vperm.slane %v42, 0
    %v44 = vmul.f32 %v35, %v43
    %v45 = vmul.f32 %v37, %v43
    %v46 = vmul.f32 %v39, %v43
    %v47 = vmul.f32 %v41, %v43
    %48 = vrot.lane.b32.xlu0 %v30, 11
    %v49 = vpop.permute.xlu0 %48
    %50 = vrot.lane.b32.xlu0 %v31, 11
    %v51 = vpop.permute.xlu0 %50
    %52 = vrot.lane.b32.xlu0 %v32, 11
    %v53 = vpop.permute.xlu0 %52
    %54 = vrot.lane.b32.xlu0 %v33, 11
    %v55 = vpop.permute.xlu0 %54
    %v56 = vld [vmem:[%s1 + $0x21] sm:$0x1]
    %v57 = vperm.slane %v56, 0
    %v58 = vmul.f32 %v49, %v57
    %v59 = vmul.f32 %v51, %v57
    %v60 = vmul.f32 %v53, %v57
    %v61 = vmul.f32 %v55, %v57
    %62 = vrot.lane.b32.xlu0 %v30, 1
    %v63 = vpop.permute.xlu0 %62
    %64 = vrot.lane.b32.xlu0 %v31, 1
    %v65 = vpop.permute.xlu0 %64
    %66 = vrot.lane.b32.xlu0 %v32, 1
    %v67 = vpop.permute.xlu0 %66
    %68 = vrot.lane.b32.xlu0 %v33, 1
    %v69 = vpop.permute.xlu0 %68
    %v70 = vld [vmem:[%s1 + $0x22] sm:$0x1]
    %v71 = vperm.slane %v70, 0
    %v72 = vmul.f32 %v63, %v71
    %v73 = vmul.f32 %v65, %v71
    %v74 = vmul.f32 %v67, %v71
    %v75 = vmul.f32 %v69, %v71
    %v76 = vld [vmem:[%s1 + $0x23] sm:$0x1]
    %v77 = vperm.slane %v76, 0
    %v78 = vmul.f32 %v30, %v77
    %v79 = vmul.f32 %v31, %v77
    %v80 = vmul.f32 %v32, %v77
    %v81 = vmul.f32 %v33, %v77
    %v82 = vld [vmem:[%s1 + $0x40] sm:$0xff]
    %v83 = vld [vmem:[%s1 + $0x48] sm:$0xff]
    %v84 = vld [vmem:[%s1 + $0x50] sm:$0xff]
    %v85 = vld [vmem:[%s1 + $0x58] sm:$0xff]
    %v86 = vld [vmem:[%s1] sm:$0xff]
    %v87 = vld [vmem:[%s1 + $0x8] sm:$0xff]
    %v88 = vld [vmem:[%s1 + $0x10] sm:$0xff]
    %v89 = vld [vmem:[%s1 + $0x18] sm:$0xff]
    %91 = vset.pattern.permute.xlu0 0
    %92 = vperm.xlu0 %91, %v86
    %v93 = vpop.permute.xlu0 %92
    %96 = vset.pattern.permute.xlu0 0
    %97 = vperm.xlu0 %96, %v87
    %v98 = vpop.permute.xlu0 %97
    %101 = vset.pattern.permute.xlu0 0
    %102 = vperm.xlu0 %101, %v88
    %v103 = vpop.permute.xlu0 %102
    %106 = vset.pattern.permute.xlu0 0
    %107 = vperm.xlu0 %106, %v89
    %v108 = vpop.permute.xlu0 %107
    %110 = vmatpush.msra.mxu0 %v81
    %111 = vmatpush.msra.mxu0 %v80
    %112 = vmatpush.msra.mxu0 %v79
    %113 = vmatpush.msra.mxu0 %v78
    %114 = vmatpush.msra.mxu0 %v75
    %115 = vmatpush.msra.mxu0 %v74
    %116 = vmatpush.msra.mxu0 %v73
    %117 = vmatpush.msra.mxu0 %v72
    %118 = vmatpush.msra.mxu0 %v61
    %119 = vmatpush.msra.mxu0 %v60
    %120 = vmatpush.msra.mxu0 %v59
    %121 = vmatpush.msra.mxu0 %v58
    %122 = vmatpush.msra.mxu0 %v47
    %123 = vmatpush.msra.mxu0 %v46
    %124 = vmatpush.msra.mxu0 %v45
    %125 = vmatpush.msra.mxu0 %v44
    %126 = vmatmul.f32.gmra.mxu0 %v82
    %v127 = vpop.f32.mrf.mxu0
    %v128 = vadd.f32 %v93, %v127
    %129 = vmatmul.f32.gmra.mxu0 %v83
    %v130 = vpop.f32.mrf.mxu0
    %v131 = vadd.f32 %v98, %v130
    %132 = vmatmul.f32.gmra.mxu0 %v84
    %v133 = vpop.f32.mrf.mxu0
    %v134 = vadd.f32 %v103, %v133
    %135 = vmatmul.f32.gmra.mxu0 %v85
    %v136 = vpop.f32.mrf.mxu0
    %v137 = vadd.f32 %v108, %v136
    %138 = vdwg.mxu0
    %v139 = vmax.f32 %v128, 0.0
    %v140 = vmax.f32 %v131, 0.0
    %v141 = vmax.f32 %v134, 0.0
    %v142 = vmax.f32 %v137, 0.0
    %143 = vrot.lane.b32.xlu0 %v139, 12
    %v144 = vpop.permute.xlu0 %143
    %145 = vrot.lane.b32.xlu0 %v140, 12
    %v146 = vpop.permute.xlu0 %145
    %147 = vrot.lane.b32.xlu0 %v141, 12
    %v148 = vpop.permute.xlu0 %147
    %149 = vrot.lane.b32.xlu0 %v142, 12
    %v150 = vpop.permute.xlu0 %149
    %v151 = vld [vmem:[%s1 + $0x24] sm:$0x1]
    %v152 = vperm.slane %v151, 0
    %v153 = vmul.f32 %v144, %v152
    %v154 = vmul.f32 %v146, %v152
    %v155 = vmul.f32 %v148, %v152
    %v156 = vmul.f32 %v150, %v152
    %157 = vrot.lane.b32.xlu0 %v139, 11
    %v158 = vpop.permute.xlu0 %157
    %159 = vrot.lane.b32.xlu0 %v140, 11
    %v160 = vpop.permute.xlu0 %159
    %161 = vrot.lane.b32.xlu0 %v141, 11
    %v162 = vpop.permute.xlu0 %161
    %163 = vrot.lane.b32.xlu0 %v142, 11
    %v164 = vpop.permute.xlu0 %163
    %v165 = vld [vmem:[%s1 + $0x25] sm:$0x1]
    %v166 = vperm.slane %v165, 0
    %v167 = vmul.f32 %v158, %v166
    %v168 = vmul.f32 %v160, %v166
    %v169 = vmul.f32 %v162, %v166
    %v170 = vmul.f32 %v164, %v166
    %171 = vrot.lane.b32.xlu0 %v139, 1
    %v172 = vpop.permute.xlu0 %171
    %173 = vrot.lane.b32.xlu0 %v140, 1
    %v174 = vpop.permute.xlu0 %173
    %175 = vrot.lane.b32.xlu0 %v141, 1
    %v176 = vpop.permute.xlu0 %175
    %177 = vrot.lane.b32.xlu0 %v142, 1
    %v178 = vpop.permute.xlu0 %177
    %v179 = vld [vmem:[%s1 + $0x26] sm:$0x1]
    %v180 = vperm.slane %v179, 0
    %v181 = vmul.f32 %v172, %v180
    %v182 = vmul.f32 %v174, %v180
    %v183 = vmul.f32 %v176, %v180
    %v184 = vmul.f32 %v178, %v180
    %v185 = vld [vmem:[%s1 + $0x27] sm:$0x1]
    %v186 = vperm.slane %v185, 0
    %v187 = vmul.f32 %v139, %v186
    %v188 = vmul.f32 %v140, %v186
    %v189 = vmul.f32 %v141, %v186
    %v190 = vmul.f32 %v142, %v186
    %v191 = vld [vmem:[%s1 + $0x60] sm:$0xff]
    %v192 = vld [vmem:[%s1 + $0x68] sm:$0xff]
    %v193 = vld [vmem:[%s1 + $0x70] sm:$0xff]
    %v194 = vld [vmem:[%s1 + $0x78] sm:$0xff]
    %195 = vset.pattern.permute.xlu0 1
    %196 = vperm.xlu0 %195, %v86
    %v197 = vpop.permute.xlu0 %196
    %199 = vset.pattern.permute.xlu0 1
    %200 = vperm.xlu0 %199, %v87
    %v201 = vpop.permute.xlu0 %200
    %203 = vset.pattern.permute.xlu0 1
    %204 = vperm.xlu0 %203, %v88
    %v205 = vpop.permute.xlu0 %204
    %207 = vset.pattern.permute.xlu0 1
    %208 = vperm.xlu0 %207, %v89
    %v209 = vpop.permute.xlu0 %208
    %211 = vmatpush.msra.mxu0 %v190
    %212 = vmatpush.msra.mxu0 %v189
    %213 = vmatpush.msra.mxu0 %v188
    %214 = vmatpush.msra.mxu0 %v187
    %215 = vmatpush.msra.mxu0 %v184
    %216 = vmatpush.msra.mxu0 %v183
    %217 = vmatpush.msra.mxu0 %v182
    %218 = vmatpush.msra.mxu0 %v181
    %219 = vmatpush.msra.mxu0 %v170
    %220 = vmatpush.msra.mxu0 %v169
    %221 = vmatpush.msra.mxu0 %v168
    %222 = vmatpush.msra.mxu0 %v167
    %223 = vmatpush.msra.mxu0 %v156
    %224 = vmatpush.msra.mxu0 %v155
    %225 = vmatpush.msra.mxu0 %v154
    %226 = vmatpush.msra.mxu0 %v153
    %227 = vmatmul.f32.gmra.mxu0 %v191
    %v228 = vpop.f32.mrf.mxu0
    %v229 = vadd.f32 %v197, %v228
    %230 = vmatmul.f32.gmra.mxu0 %v192
    %v231 = vpop.f32.mrf.mxu0
    %v232 = vadd.f32 %v201, %v231
    %233 = vmatmul.f32.gmra.mxu0 %v193
    %v234 = vpop.f32.mrf.mxu0
    %v235 = vadd.f32 %v205, %v234
    %236 = vmatmul.f32.gmra.mxu0 %v194
    %v237 = vpop.f32.mrf.mxu0
    %v238 = vadd.f32 %v209, %v237
    %239 = vdwg.mxu0
    %v240 = vmax.f32 %v229, 0.0
    %v241 = vmax.f32 %v232, 0.0
    %v242 = vmax.f32 %v235, 0.0
    %v243 = vmax.f32 %v238, 0.0
    %244 = vrot.lane.b32.xlu0 %v240, 12
    %v245 = vpop.permute.xlu0 %244
    %246 = vrot.lane.b32.xlu0 %v241, 12
    %v247 = vpop.permute.xlu0 %246
    %248 = vrot.lane.b32.xlu0 %v242, 12
    %v249 = vpop.permute.xlu0 %248
    %250 = vrot.lane.b32.xlu0 %v243, 12
    %v251 = vpop.permute.xlu0 %250
    %v252 = vld [vmem:[%s1 + $0x28] sm:$0x1]
    %v253 = vperm.slane %v252, 0
    %v254 = vmul.f32 %v245, %v253
    %v255 = vmul.f32 %v247, %v253
    %v256 = vmul.f32 %v249, %v253
    %v257 = vmul.f32 %v251, %v253
    %258 = vrot.lane.b32.xlu0 %v240, 11
    %v259 = vpop.permute.xlu0 %258
    %260 = vrot.lane.b32.xlu0 %v241, 11
    %v261 = vpop.permute.xlu0 %260
    %262 = vrot.lane.b32.xlu0 %v242, 11
    %v263 = vpop.permute.xlu0 %262
    %264 = vrot.lane.b32.xlu0 %v243, 11
    %v265 = vpop.permute.xlu0 %264
    %v266 = vld [vmem:[%s1 + $0x29] sm:$0x1]
    %v267 = vperm.slane %v266, 0
    %v268 = vmul.f32 %v259, %v267
    %v269 = vmul.f32 %v261, %v267
    %v270 = vmul.f32 %v263, %v267
    %v271 = vmul.f32 %v265, %v267
    %272 = vrot.lane.b32.xlu0 %v240, 1
    %v273 = vpop.permute.xlu0 %272
    %274 = vrot.lane.b32.xlu0 %v241, 1
    %v275 = vpop.permute.xlu0 %274
    %276 = vrot.lane.b32.xlu0 %v242, 1
    %v277 = vpop.permute.xlu0 %276
    %278 = vrot.lane.b32.xlu0 %v243, 1
    %v279 = vpop.permute.xlu0 %278
    %v280 = vld [vmem:[%s1 + $0x2a] sm:$0x1]
    %v281 = vperm.slane %v280, 0
    %v282 = vmul.f32 %v273, %v281
    %v283 = vmul.f32 %v275, %v281
    %v284 = vmul.f32 %v277, %v281
    %v285 = vmul.f32 %v279, %v281
    %v286 = vld [vmem:[%s1 + $0x2b] sm:$0x1]
    %v287 = vperm.slane %v286, 0
    %v288 = vmul.f32 %v240, %v287
    %v289 = vmul.f32 %v241, %v287
    %v290 = vmul.f32 %v242, %v287
    %v291 = vmul.f32 %v243, %v287
    %v292 = vld [vmem:[%s1 + $0x80] sm:$0xff]
    %v293 = vld [vmem:[%s1 + $0x88] sm:$0xff]
    %v294 = vld [vmem:[%s1 + $0x90] sm:$0xff]
    %v295 = vld [vmem:[%s1 + $0x98] sm:$0xff]
    %296 = vset.pattern.permute.xlu0 2
    %297 = vperm.xlu0 %296, %v86
    %v298 = vpop.permute.xlu0 %297
    %300 = vset.pattern.permute.xlu0 2
    %301 = vperm.xlu0 %300, %v87
    %v302 = vpop.permute.xlu0 %301
    %304 = vset.pattern.permute.xlu0 2
    %305 = vperm.xlu0 %304, %v88
    %v306 = vpop.permute.xlu0 %305
    %308 = vset.pattern.permute.xlu0 2
    %309 = vperm.xlu0 %308, %v89
    %v310 = vpop.permute.xlu0 %309
    %312 = vmatpush.msra.mxu0 %v291
    %313 = vmatpush.msra.mxu0 %v290
    %314 = vmatpush.msra.mxu0 %v289
    %315 = vmatpush.msra.mxu0 %v288
    %316 = vmatpush.msra.mxu0 %v285
    %317 = vmatpush.msra.mxu0 %v284
    %318 = vmatpush.msra.mxu0 %v283
    %319 = vmatpush.msra.mxu0 %v282
    %320 = vmatpush.msra.mxu0 %v271
    %321 = vmatpush.msra.mxu0 %v270
    %322 = vmatpush.msra.mxu0 %v269
    %323 = vmatpush.msra.mxu0 %v268
    %324 = vmatpush.msra.mxu0 %v257
    %325 = vmatpush.msra.mxu0 %v256
    %326 = vmatpush.msra.mxu0 %v255
    %327 = vmatpush.msra.mxu0 %v254
    %328 = vmatmul.f32.gmra.mxu0 %v292
    %v329 = vpop.f32.mrf.mxu0
    %v330 = vadd.f32 %v298, %v329
    %331 = vmatmul.f32.gmra.mxu0 %v293
    %v332 = vpop.f32.mrf.mxu0
    %v333 = vadd.f32 %v302, %v332
    %334 = vmatmul.f32.gmra.mxu0 %v294
    %v335 = vpop.f32.mrf.mxu0
    %v336 = vadd.f32 %v306, %v335
    %337 = vmatmul.f32.gmra.mxu0 %v295
    %v338 = vpop.f32.mrf.mxu0
    %v339 = vadd.f32 %v310, %v338
    %340 = vdwg.mxu0
    %v341 = vmax.f32 %v330, 0.0
    %v342 = vmax.f32 %v333, 0.0
    %v343 = vmax.f32 %v336, 0.0
    %v344 = vmax.f32 %v339, 0.0
    %345 = vrot.lane.b32.xlu0 %v341, 12
    %v346 = vpop.permute.xlu0 %345
    %347 = vrot.lane.b32.xlu0 %v342, 12
    %v348 = vpop.permute.xlu0 %347
    %349 = vrot.lane.b32.xlu0 %v343, 12
    %v350 = vpop.permute.xlu0 %349
    %351 = vrot.lane.b32.xlu0 %v344, 12
    %v352 = vpop.permute.xlu0 %351
    %v353 = vld [vmem:[%s1 + $0x2c] sm:$0x1]
    %v354 = vperm.slane %v353, 0
    %v355 = vmul.f32 %v346, %v354
    %v356 = vmul.f32 %v348, %v354
    %v357 = vmul.f32 %v350, %v354
    %v358 = vmul.f32 %v352, %v354
    %359 = vrot.lane.b32.xlu0 %v341, 11
    %v360 = vpop.permute.xlu0 %359
    %361 = vrot.lane.b32.xlu0 %v342, 11
    %v362 = vpop.permute.xlu0 %361
    %363 = vrot.lane.b32.xlu0 %v343, 11
    %v364 = vpop.permute.xlu0 %363
    %365 = vrot.lane.b32.xlu0 %v344, 11
    %v366 = vpop.permute.xlu0 %365
    %v367 = vld [vmem:[%s1 + $0x2d] sm:$0x1]
    %v368 = vperm.slane %v367, 0
    %v369 = vmul.f32 %v360, %v368
    %v370 = vmul.f32 %v362, %v368
    %v371 = vmul.f32 %v364, %v368
    %v372 = vmul.f32 %v366, %v368
    %373 = vrot.lane.b32.xlu0 %v341, 1
    %v374 = vpop.permute.xlu0 %373
    %375 = vrot.lane.b32.xlu0 %v342, 1
    %v376 = vpop.permute.xlu0 %375
    %377 = vrot.lane.b32.xlu0 %v343, 1
    %v378 = vpop.permute.xlu0 %377
    %379 = vrot.lane.b32.xlu0 %v344, 1
    %v380 = vpop.permute.xlu0 %379
    %v381 = vld [vmem:[%s1 + $0x2e] sm:$0x1]
    %v382 = vperm.slane %v381, 0
    %v383 = vmul.f32 %v374, %v382
    %v384 = vmul.f32 %v376, %v382
    %v385 = vmul.f32 %v378, %v382
    %v386 = vmul.f32 %v380, %v382
    %v387 = vld [vmem:[%s1 + $0x2f] sm:$0x1]
    %v388 = vperm.slane %v387, 0
    %v389 = vmul.f32 %v341, %v388
    %v390 = vmul.f32 %v342, %v388
    %v391 = vmul.f32 %v343, %v388
    %v392 = vmul.f32 %v344, %v388
    %v393 = vld [vmem:[%s1 + $0xa0] sm:$0xff]
    %v394 = vld [vmem:[%s1 + $0xa8] sm:$0xff]
    %v395 = vld [vmem:[%s1 + $0xb0] sm:$0xff]
    %v396 = vld [vmem:[%s1 + $0xb8] sm:$0xff]
    %397 = vset.pattern.permute.xlu0 3
    %398 = vperm.xlu0 %397, %v86
    %v399 = vpop.permute.xlu0 %398
    %401 = vset.pattern.permute.xlu0 3
    %402 = vperm.xlu0 %401, %v87
    %v403 = vpop.permute.xlu0 %402
    %405 = vset.pattern.permute.xlu0 3
    %406 = vperm.xlu0 %405, %v88
    %v407 = vpop.permute.xlu0 %406
    %409 = vset.pattern.permute.xlu0 3
    %410 = vperm.xlu0 %409, %v89
    %v411 = vpop.permute.xlu0 %410
    %413 = vmatpush.msra.mxu0 %v392
    %414 = vmatpush.msra.mxu0 %v391
    %415 = vmatpush.msra.mxu0 %v390
    %416 = vmatpush.msra.mxu0 %v389
    %417 = vmatpush.msra.mxu0 %v386
    %418 = vmatpush.msra.mxu0 %v385
    %419 = vmatpush.msra.mxu0 %v384
    %420 = vmatpush.msra.mxu0 %v383
    %421 = vmatpush.msra.mxu0 %v372
    %422 = vmatpush.msra.mxu0 %v371
    %423 = vmatpush.msra.mxu0 %v370
    %424 = vmatpush.msra.mxu0 %v369
    %425 = vmatpush.msra.mxu0 %v358
    %426 = vmatpush.msra.mxu0 %v357
    %427 = vmatpush.msra.mxu0 %v356
    %428 = vmatpush.msra.mxu0 %v355
    %429 = vmatmul.f32.gmra.mxu0 %v393
    %v430 = vpop.f32.mrf.mxu0
    %v431 = vadd.f32 %v399, %v430
    %432 = vmatmul.f32.gmra.mxu0 %v394
    %v433 = vpop.f32.mrf.mxu0
    %v434 = vadd.f32 %v403, %v433
    %435 = vmatmul.f32.gmra.mxu0 %v395
    %v436 = vpop.f32.mrf.mxu0
    %v437 = vadd.f32 %v407, %v436
    %438 = vmatmul.f32.gmra.mxu0 %v396
    %v439 = vpop.f32.mrf.mxu0
    %v440 = vadd.f32 %v411, %v439
    %441 = vdwg.mxu0
    %v442 = vmax.f32 %v431, 0.0
    %v443 = vmax.f32 %v434, 0.0
    %v444 = vmax.f32 %v437, 0.0
    %v445 = vmax.f32 %v440, 0.0
    %446 = vrot.lane.b32.xlu0 %v442, 12
    %v447 = vpop.permute.xlu0 %446
    %448 = vrot.lane.b32.xlu0 %v443, 12
    %v449 = vpop.permute.xlu0 %448
    %450 = vrot.lane.b32.xlu0 %v444, 12
    %v451 = vpop.permute.xlu0 %450
    %452 = vrot.lane.b32.xlu0 %v445, 12
    %v453 = vpop.permute.xlu0 %452
    %v454 = vld [vmem:[%s1 + $0x30] sm:$0x1]
    %v455 = vperm.slane %v454, 0
    %v456 = vmul.f32 %v447, %v455
    %v457 = vmul.f32 %v449, %v455
    %v458 = vmul.f32 %v451, %v455
    %v459 = vmul.f32 %v453, %v455
    %460 = vrot.lane.b32.xlu0 %v442, 11
    %v461 = vpop.permute.xlu0 %460
    %462 = vrot.lane.b32.xlu0 %v443, 11
    %v463 = vpop.permute.xlu0 %462
    %464 = vrot.lane.b32.xlu0 %v444, 11
    %v465 = vpop.permute.xlu0 %464
    %466 = vrot.lane.b32.xlu0 %v445, 11
    %v467 = vpop.permute.xlu0 %466
    %v468 = vld [vmem:[%s1 + $0x31] sm:$0x1]
    %v469 = vperm.slane %v468, 0
    %v470 = vmul.f32 %v461, %v469
    %v471 = vmul.f32 %v463, %v469
    %v472 = vmul.f32 %v465, %v469
    %v473 = vmul.f32 %v467, %v469
    %474 = vrot.lane.b32.xlu0 %v442, 1
    %v475 = vpop.permute.xlu0 %474
    %476 = vrot.lane.b32.xlu0 %v443, 1
    %v477 = vpop.permute.xlu0 %476
    %478 = vrot.lane.b32.xlu0 %v444, 1
    %v479 = vpop.permute.xlu0 %478
    %480 = vrot.lane.b32.xlu0 %v445, 1
    %v481 = vpop.permute.xlu0 %480
    %v482 = vld [vmem:[%s1 + $0x32] sm:$0x1]
    %v483 = vperm.slane %v482, 0
    %v484 = vmul.f32 %v475, %v483
    %v485 = vmul.f32 %v477, %v483
    %v486 = vmul.f32 %v479, %v483
    %v487 = vmul.f32 %v481, %v483
    %v488 = vld [vmem:[%s1 + $0x33] sm:$0x1]
    %v489 = vperm.slane %v488, 0
    %v490 = vmul.f32 %v442, %v489
    %v491 = vmul.f32 %v443, %v489
    %v492 = vmul.f32 %v444, %v489
    %v493 = vmul.f32 %v445, %v489
    %v494 = vld [vmem:[%s1 + $0xc0] sm:$0xff]
    %v495 = vld [vmem:[%s1 + $0xc8] sm:$0xff]
    %v496 = vld [vmem:[%s1 + $0xd0] sm:$0xff]
    %v497 = vld [vmem:[%s1 + $0xd8] sm:$0xff]
    %498 = vset.pattern.permute.xlu0 4
    %499 = vperm.xlu0 %498, %v86
    %v500 = vpop.permute.xlu0 %499
    %502 = vset.pattern.permute.xlu0 4
    %503 = vperm.xlu0 %502, %v87
    %v504 = vpop.permute.xlu0 %503
    %506 = vset.pattern.permute.xlu0 4
    %507 = vperm.xlu0 %506, %v88
    %v508 = vpop.permute.xlu0 %507
    %510 = vset.pattern.permute.xlu0 4
    %511 = vperm.xlu0 %510, %v89
    %v512 = vpop.permute.xlu0 %511
    %514 = vmatpush.msra.mxu0 %v493
    %515 = vmatpush.msra.mxu0 %v492
    %516 = vmatpush.msra.mxu0 %v491
    %517 = vmatpush.msra.mxu0 %v490
    %518 = vmatpush.msra.mxu0 %v487
    %519 = vmatpush.msra.mxu0 %v486
    %520 = vmatpush.msra.mxu0 %v485
    %521 = vmatpush.msra.mxu0 %v484
    %522 = vmatpush.msra.mxu0 %v473
    %523 = vmatpush.msra.mxu0 %v472
    %524 = vmatpush.msra.mxu0 %v471
    %525 = vmatpush.msra.mxu0 %v470
    %526 = vmatpush.msra.mxu0 %v459
    %527 = vmatpush.msra.mxu0 %v458
    %528 = vmatpush.msra.mxu0 %v457
    %529 = vmatpush.msra.mxu0 %v456
    %530 = vmatmul.f32.gmra.mxu0 %v494
    %v531 = vpop.f32.mrf.mxu0
    %v532 = vadd.f32 %v500, %v531
    %533 = vmatmul.f32.gmra.mxu0 %v495
    %v534 = vpop.f32.mrf.mxu0
    %v535 = vadd.f32 %v504, %v534
    %536 = vmatmul.f32.gmra.mxu0 %v496
    %v537 = vpop.f32.mrf.mxu0
    %v538 = vadd.f32 %v508, %v537
    %539 = vmatmul.f32.gmra.mxu0 %v497
    %v540 = vpop.f32.mrf.mxu0
    %v541 = vadd.f32 %v512, %v540
    %542 = vdwg.mxu0
    %v543 = vmax.f32 %v532, 0.0
    %v544 = vmax.f32 %v535, 0.0
    %v545 = vmax.f32 %v538, 0.0
    %v546 = vmax.f32 %v541, 0.0
    %v547 = vld [vmem:[#allocation2] sm:$0xf]
    %v548 = vld [vmem:[#allocation2 + $0x4] sm:$0xf]
    %v549 = vld [vmem:[#allocation2 + $0x8] sm:$0xf]
    %v550 = vld [vmem:[#allocation2 + $0xc] sm:$0xf]
    %v551 = vunpack.c.l.bf16 %v547
    %v552 = vunpack.c.l.bf16 %v548
    %v553 = vunpack.c.l.bf16 %v549
    %v554 = vunpack.c.l.bf16 %v550
    %v555 = vperm.slane %v543, 0
    %v556 = vmul.f32 %v551, %v555
    %v557 = vmul.f32 %v552, %v555
    %v558 = vmul.f32 %v553, %v555
    %v559 = vmul.f32 %v554, %v555
    %v560 = vadd.f32 %v556, 0.0
    %v561 = vadd.f32 %v557, 0.0
    %v562 = vadd.f32 %v558, 0.0
    %v563 = vadd.f32 %v559, 0.0
    %v564 = vld [vmem:[#allocation2 + $0x10] sm:$0xf]
    %v565 = vld [vmem:[#allocation2 + $0x14] sm:$0xf]
    %v566 = vld [vmem:[#allocation2 + $0x18] sm:$0xf]
    %v567 = vld [vmem:[#allocation2 + $0x1c] sm:$0xf]
    %v568 = vunpack.c.l.bf16 %v564
    %v569 = vunpack.c.l.bf16 %v565
    %v570 = vunpack.c.l.bf16 %v566
    %v571 = vunpack.c.l.bf16 %v567
    %v572 = vperm.slane %v543, 1
    %v573 = vmul.f32 %v568, %v572
    %v574 = vmul.f32 %v569, %v572
    %v575 = vmul.f32 %v570, %v572
    %v576 = vmul.f32 %v571, %v572
    %v577 = vadd.f32 %v560, %v573
    %v578 = vadd.f32 %v561, %v574
    %v579 = vadd.f32 %v562, %v575
    %v580 = vadd.f32 %v563, %v576
    %v581 = vld [vmem:[#allocation2 + $0x20] sm:$0xf]
    %v582 = vld [vmem:[#allocation2 + $0x24] sm:$0xf]
    %v583 = vld [vmem:[#allocation2 + $0x28] sm:$0xf]
    %v584 = vld [vmem:[#allocation2 + $0x2c] sm:$0xf]
    %v585 = vunpack.c.l.bf16 %v581
    %v586 = vunpack.c.l.bf16 %v582
    %v587 = vunpack.c.l.bf16 %v583
    %v588 = vunpack.c.l.bf16 %v584
    %v589 = vperm.slane %v543, 2
    %v590 = vmul.f32 %v585, %v589
    %v591 = vmul.f32 %v586, %v589
    %v592 = vmul.f32 %v587, %v589
    %v593 = vmul.f32 %v588, %v589
    %v594 = vadd.f32 %v577, %v590
    %v595 = vadd.f32 %v578, %v591
    %v596 = vadd.f32 %v579, %v592
    %v597 = vadd.f32 %v580, %v593
    %v598 = vld [vmem:[#allocation2 + $0x30] sm:$0xf]
    %v599 = vld [vmem:[#allocation2 + $0x34] sm:$0xf]
    %v600 = vld [vmem:[#allocation2 + $0x38] sm:$0xf]
    %v601 = vld [vmem:[#allocation2 + $0x3c] sm:$0xf]
    %v602 = vunpack.c.l.bf16 %v598
    %v603 = vunpack.c.l.bf16 %v599
    %v604 = vunpack.c.l.bf16 %v600
    %v605 = vunpack.c.l.bf16 %v601
    %v606 = vperm.slane %v543, 3
    %v607 = vmul.f32 %v602, %v606
    %v608 = vmul.f32 %v603, %v606
    %v609 = vmul.f32 %v604, %v606
    %v610 = vmul.f32 %v605, %v606
    %v611 = vadd.f32 %v594, %v607
    %v612 = vadd.f32 %v595, %v608
    %v613 = vadd.f32 %v596, %v609
    %v614 = vadd.f32 %v597, %v610
    %v615 = vld [vmem:[#allocation2 + $0x40] sm:$0xf]
    %v616 = vld [vmem:[#allocation2 + $0x44] sm:$0xf]
    %v617 = vld [vmem:[#allocation2 + $0x48] sm:$0xf]
    %v618 = vld [vmem:[#allocation2 + $0x4c] sm:$0xf]
    %v619 = vunpack.c.l.bf16 %v615
    %v620 = vunpack.c.l.bf16 %v616
    %v621 = vunpack.c.l.bf16 %v617
    %v622 = vunpack.c.l.bf16 %v618
    %v623 = vperm.slane %v543, 4
    %v624 = vmul.f32 %v619, %v623
    %v625 = vmul.f32 %v620, %v623
    %v626 = vmul.f32 %v621, %v623
    %v627 = vmul.f32 %v622, %v623
    %v628 = vadd.f32 %v611, %v624
    %v629 = vadd.f32 %v612, %v625
    %v630 = vadd.f32 %v613, %v626
    %v631 = vadd.f32 %v614, %v627
    %v632 = vld [vmem:[#allocation2 + $0x50] sm:$0xf]
    %v633 = vld [vmem:[#allocation2 + $0x54] sm:$0xf]
    %v634 = vld [vmem:[#allocation2 + $0x58] sm:$0xf]
    %v635 = vld [vmem:[#allocation2 + $0x5c] sm:$0xf]
    %v636 = vunpack.c.l.bf16 %v632
    %v637 = vunpack.c.l.bf16 %v633
    %v638 = vunpack.c.l.bf16 %v634
    %v639 = vunpack.c.l.bf16 %v635
    %v640 = vperm.slane %v543, 5
    %v641 = vmul.f32 %v636, %v640
    %v642 = vmul.f32 %v637, %v640
    %v643 = vmul.f32 %v638, %v640
    %v644 = vmul.f32 %v639, %v640
    %v645 = vadd.f32 %v628, %v641
    %v646 = vadd.f32 %v629, %v642
    %v647 = vadd.f32 %v630, %v643
    %v648 = vadd.f32 %v631, %v644
    %v649 = vld [vmem:[#allocation2 + $0x60] sm:$0xf]
    %v650 = vld [vmem:[#allocation2 + $0x64] sm:$0xf]
    %v651 = vld [vmem:[#allocation2 + $0x68] sm:$0xf]
    %v652 = vld [vmem:[#allocation2 + $0x6c] sm:$0xf]
    %v653 = vunpack.c.l.bf16 %v649
    %v654 = vunpack.c.l.bf16 %v650
    %v655 = vunpack.c.l.bf16 %v651
    %v656 = vunpack.c.l.bf16 %v652
    %v657 = vperm.slane %v543, 6
    %v658 = vmul.f32 %v653, %v657
    %v659 = vmul.f32 %v654, %v657
    %v660 = vmul.f32 %v655, %v657
    %v661 = vmul.f32 %v656, %v657
    %v662 = vadd.f32 %v645, %v658
    %v663 = vadd.f32 %v646, %v659
    %v664 = vadd.f32 %v647, %v660
    %v665 = vadd.f32 %v648, %v661
    %v666 = vld [vmem:[#allocation2 + $0x70] sm:$0xf]
    %v667 = vld [vmem:[#allocation2 + $0x74] sm:$0xf]
    %v668 = vld [vmem:[#allocation2 + $0x78] sm:$0xf]
    %v669 = vld [vmem:[#allocation2 + $0x7c] sm:$0xf]
    %v670 = vunpack.c.l.bf16 %v666
    %v671 = vunpack.c.l.bf16 %v667
    %v672 = vunpack.c.l.bf16 %v668
    %v673 = vunpack.c.l.bf16 %v669
    %v674 = vperm.slane %v543, 7
    %v675 = vmul.f32 %v670, %v674
    %v676 = vmul.f32 %v671, %v674
    %v677 = vmul.f32 %v672, %v674
    %v678 = vmul.f32 %v673, %v674
    %v679 = vadd.f32 %v662, %v675
    %v680 = vadd.f32 %v663, %v676
    %v681 = vadd.f32 %v664, %v677
    %v682 = vadd.f32 %v665, %v678
    %v683 = vld [vmem:[#allocation2 + $0x80] sm:$0xf]
    %v684 = vld [vmem:[#allocation2 + $0x84] sm:$0xf]
    %v685 = vld [vmem:[#allocation2 + $0x88] sm:$0xf]
    %v686 = vld [vmem:[#allocation2 + $0x8c] sm:$0xf]
    %v687 = vunpack.c.l.bf16 %v683
    %v688 = vunpack.c.l.bf16 %v684
    %v689 = vunpack.c.l.bf16 %v685
    %v690 = vunpack.c.l.bf16 %v686
    %v691 = vperm.slane %v544, 0
    %v692 = vmul.f32 %v687, %v691
    %v693 = vmul.f32 %v688, %v691
    %v694 = vmul.f32 %v689, %v691
    %v695 = vmul.f32 %v690, %v691
    %v696 = vadd.f32 %v679, %v692
    %v697 = vadd.f32 %v680, %v693
    %v698 = vadd.f32 %v681, %v694
    %v699 = vadd.f32 %v682, %v695
    %v700 = vld [vmem:[#allocation2 + $0x90] sm:$0xf]
    %v701 = vld [vmem:[#allocation2 + $0x94] sm:$0xf]
    %v702 = vld [vmem:[#allocation2 + $0x98] sm:$0xf]
    %v703 = vld [vmem:[#allocation2 + $0x9c] sm:$0xf]
    %v704 = vunpack.c.l.bf16 %v700
    %v705 = vunpack.c.l.bf16 %v701
    %v706 = vunpack.c.l.bf16 %v702
    %v707 = vunpack.c.l.bf16 %v703
    %v708 = vperm.slane %v544, 1
    %v709 = vmul.f32 %v704, %v708
    %v710 = vmul.f32 %v705, %v708
    %v711 = vmul.f32 %v706, %v708
    %v712 = vmul.f32 %v707, %v708
    %v713 = vadd.f32 %v696, %v709
    %v714 = vadd.f32 %v697, %v710
    %v715 = vadd.f32 %v698, %v711
    %v716 = vadd.f32 %v699, %v712
    %v717 = vld [vmem:[#allocation2 + $0xa0] sm:$0xf]
    %v718 = vld [vmem:[#allocation2 + $0xa4] sm:$0xf]
    %v719 = vld [vmem:[#allocation2 + $0xa8] sm:$0xf]
    %v720 = vld [vmem:[#allocation2 + $0xac] sm:$0xf]
    %v721 = vunpack.c.l.bf16 %v717
    %v722 = vunpack.c.l.bf16 %v718
    %v723 = vunpack.c.l.bf16 %v719
    %v724 = vunpack.c.l.bf16 %v720
    %v725 = vperm.slane %v544, 2
    %v726 = vmul.f32 %v721, %v725
    %v727 = vmul.f32 %v722, %v725
    %v728 = vmul.f32 %v723, %v725
    %v729 = vmul.f32 %v724, %v725
    %v730 = vadd.f32 %v713, %v726
    %v731 = vadd.f32 %v714, %v727
    %v732 = vadd.f32 %v715, %v728
    %v733 = vadd.f32 %v716, %v729
    %v734 = vld [vmem:[#allocation2 + $0xb0] sm:$0xf]
    %v735 = vld [vmem:[#allocation2 + $0xb4] sm:$0xf]
    %v736 = vld [vmem:[#allocation2 + $0xb8] sm:$0xf]
    %v737 = vld [vmem:[#allocation2 + $0xbc] sm:$0xf]
    %v738 = vunpack.c.l.bf16 %v734
    %v739 = vunpack.c.l.bf16 %v735
    %v740 = vunpack.c.l.bf16 %v736
    %v741 = vunpack.c.l.bf16 %v737
    %v742 = vperm.slane %v544, 3
    %v743 = vmul.f32 %v738, %v742
    %v744 = vmul.f32 %v739, %v742
    %v745 = vmul.f32 %v740, %v742
    %v746 = vmul.f32 %v741, %v742
    %v747 = vadd.f32 %v730, %v743
    %v748 = vadd.f32 %v731, %v744
    %v749 = vadd.f32 %v732, %v745
    %v750 = vadd.f32 %v733, %v746
    %v751 = vld [vmem:[#allocation2 + $0xc0] sm:$0xf]
    %v752 = vld [vmem:[#allocation2 + $0xc4] sm:$0xf]
    %v753 = vld [vmem:[#allocation2 + $0xc8] sm:$0xf]
    %v754 = vld [vmem:[#allocation2 + $0xcc] sm:$0xf]
    %v755 = vunpack.c.l.bf16 %v751
    %v756 = vunpack.c.l.bf16 %v752
    %v757 = vunpack.c.l.bf16 %v753
    %v758 = vunpack.c.l.bf16 %v754
    %v759 = vperm.slane %v544, 4
    %v760 = vmul.f32 %v755, %v759
    %v761 = vmul.f32 %v756, %v759
    %v762 = vmul.f32 %v757, %v759
    %v763 = vmul.f32 %v758, %v759
    %v764 = vadd.f32 %v747, %v760
    %v765 = vadd.f32 %v748, %v761
    %v766 = vadd.f32 %v749, %v762
    %v767 = vadd.f32 %v750, %v763
    %v768 = vld [vmem:[#allocation2 + $0xd0] sm:$0xf]
    %v769 = vld [vmem:[#allocation2 + $0xd4] sm:$0xf]
    %v770 = vld [vmem:[#allocation2 + $0xd8] sm:$0xf]
    %v771 = vld [vmem:[#allocation2 + $0xdc] sm:$0xf]
    %v772 = vunpack.c.l.bf16 %v768
    %v773 = vunpack.c.l.bf16 %v769
    %v774 = vunpack.c.l.bf16 %v770
    %v775 = vunpack.c.l.bf16 %v771
    %v776 = vperm.slane %v544, 5
    %v777 = vmul.f32 %v772, %v776
    %v778 = vmul.f32 %v773, %v776
    %v779 = vmul.f32 %v774, %v776
    %v780 = vmul.f32 %v775, %v776
    %v781 = vadd.f32 %v764, %v777
    %v782 = vadd.f32 %v765, %v778
    %v783 = vadd.f32 %v766, %v779
    %v784 = vadd.f32 %v767, %v780
    %v785 = vld [vmem:[#allocation2 + $0xe0] sm:$0xf]
    %v786 = vld [vmem:[#allocation2 + $0xe4] sm:$0xf]
    %v787 = vld [vmem:[#allocation2 + $0xe8] sm:$0xf]
    %v788 = vld [vmem:[#allocation2 + $0xec] sm:$0xf]
    %v789 = vunpack.c.l.bf16 %v785
    %v790 = vunpack.c.l.bf16 %v786
    %v791 = vunpack.c.l.bf16 %v787
    %v792 = vunpack.c.l.bf16 %v788
    %v793 = vperm.slane %v544, 6
    %v794 = vmul.f32 %v789, %v793
    %v795 = vmul.f32 %v790, %v793
    %v796 = vmul.f32 %v791, %v793
    %v797 = vmul.f32 %v792, %v793
    %v798 = vadd.f32 %v781, %v794
    %v799 = vadd.f32 %v782, %v795
    %v800 = vadd.f32 %v783, %v796
    %v801 = vadd.f32 %v784, %v797
    %v802 = vld [vmem:[#allocation2 + $0xf0] sm:$0xf]
    %v803 = vld [vmem:[#allocation2 + $0xf4] sm:$0xf]
    %v804 = vld [vmem:[#allocation2 + $0xf8] sm:$0xf]
    %v805 = vld [vmem:[#allocation2 + $0xfc] sm:$0xf]
    %v806 = vunpack.c.l.bf16 %v802
    %v807 = vunpack.c.l.bf16 %v803
    %v808 = vunpack.c.l.bf16 %v804
    %v809 = vunpack.c.l.bf16 %v805
    %v810 = vperm.slane %v544, 7
    %v811 = vmul.f32 %v806, %v810
    %v812 = vmul.f32 %v807, %v810
    %v813 = vmul.f32 %v808, %v810
    %v814 = vmul.f32 %v809, %v810
    %v815 = vadd.f32 %v798, %v811
    %v816 = vadd.f32 %v799, %v812
    %v817 = vadd.f32 %v800, %v813
    %v818 = vadd.f32 %v801, %v814
    %v819 = vld [vmem:[#allocation2 + $0x100] sm:$0xf]
    %v820 = vld [vmem:[#allocation2 + $0x104] sm:$0xf]
    %v821 = vld [vmem:[#allocation2 + $0x108] sm:$0xf]
    %v822 = vld [vmem:[#allocation2 + $0x10c] sm:$0xf]
    %v823 = vunpack.c.l.bf16 %v819
    %v824 = vunpack.c.l.bf16 %v820
    %v825 = vunpack.c.l.bf16 %v821
    %v826 = vunpack.c.l.bf16 %v822
    %v827 = vperm.slane %v545, 0
    %v828 = vmul.f32 %v823, %v827
    %v829 = vmul.f32 %v824, %v827
    %v830 = vmul.f32 %v825, %v827
    %v831 = vmul.f32 %v826, %v827
    %v832 = vadd.f32 %v815, %v828
    %v833 = vadd.f32 %v816, %v829
    %v834 = vadd.f32 %v817, %v830
    %v835 = vadd.f32 %v818, %v831
    %v836 = vld [vmem:[#allocation2 + $0x110] sm:$0xf]
    %v837 = vld [vmem:[#allocation2 + $0x114] sm:$0xf]
    %v838 = vld [vmem:[#allocation2 + $0x118] sm:$0xf]
    %v839 = vld [vmem:[#allocation2 + $0x11c] sm:$0xf]
    %v840 = vunpack.c.l.bf16 %v836
    %v841 = vunpack.c.l.bf16 %v837
    %v842 = vunpack.c.l.bf16 %v838
    %v843 = vunpack.c.l.bf16 %v839
    %v844 = vperm.slane %v545, 1
    %v845 = vmul.f32 %v840, %v844
    %v846 = vmul.f32 %v841, %v844
    %v847 = vmul.f32 %v842, %v844
    %v848 = vmul.f32 %v843, %v844
    %v849 = vadd.f32 %v832, %v845
    %v850 = vadd.f32 %v833, %v846
    %v851 = vadd.f32 %v834, %v847
    %v852 = vadd.f32 %v835, %v848
    %v853 = vld [vmem:[#allocation2 + $0x120] sm:$0xf]
    %v854 = vld [vmem:[#allocation2 + $0x124] sm:$0xf]
    %v855 = vld [vmem:[#allocation2 + $0x128] sm:$0xf]
    %v856 = vld [vmem:[#allocation2 + $0x12c] sm:$0xf]
    %v857 = vunpack.c.l.bf16 %v853
    %v858 = vunpack.c.l.bf16 %v854
    %v859 = vunpack.c.l.bf16 %v855
    %v860 = vunpack.c.l.bf16 %v856
    %v861 = vperm.slane %v545, 2
    %v862 = vmul.f32 %v857, %v861
    %v863 = vmul.f32 %v858, %v861
    %v864 = vmul.f32 %v859, %v861
    %v865 = vmul.f32 %v860, %v861
    %v866 = vadd.f32 %v849, %v862
    %v867 = vadd.f32 %v850, %v863
    %v868 = vadd.f32 %v851, %v864
    %v869 = vadd.f32 %v852, %v865
    %v870 = vld [vmem:[#allocation2 + $0x130] sm:$0xf]
    %v871 = vld [vmem:[#allocation2 + $0x134] sm:$0xf]
    %v872 = vld [vmem:[#allocation2 + $0x138] sm:$0xf]
    %v873 = vld [vmem:[#allocation2 + $0x13c] sm:$0xf]
    %v874 = vunpack.c.l.bf16 %v870
    %v875 = vunpack.c.l.bf16 %v871
    %v876 = vunpack.c.l.bf16 %v872
    %v877 = vunpack.c.l.bf16 %v873
    %v878 = vperm.slane %v545, 3
    %v879 = vmul.f32 %v874, %v878
    %v880 = vmul.f32 %v875, %v878
    %v881 = vmul.f32 %v876, %v878
    %v882 = vmul.f32 %v877, %v878
    %v883 = vadd.f32 %v866, %v879
    %v884 = vadd.f32 %v867, %v880
    %v885 = vadd.f32 %v868, %v881
    %v886 = vadd.f32 %v869, %v882
    %v887 = vld [vmem:[#allocation2 + $0x140] sm:$0xf]
    %v888 = vld [vmem:[#allocation2 + $0x144] sm:$0xf]
    %v889 = vld [vmem:[#allocation2 + $0x148] sm:$0xf]
    %v890 = vld [vmem:[#allocation2 + $0x14c] sm:$0xf]
    %v891 = vunpack.c.l.bf16 %v887
    %v892 = vunpack.c.l.bf16 %v888
    %v893 = vunpack.c.l.bf16 %v889
    %v894 = vunpack.c.l.bf16 %v890
    %v895 = vperm.slane %v545, 4
    %v896 = vmul.f32 %v891, %v895
    %v897 = vmul.f32 %v892, %v895
    %v898 = vmul.f32 %v893, %v895
    %v899 = vmul.f32 %v894, %v895
    %v900 = vadd.f32 %v883, %v896
    %v901 = vadd.f32 %v884, %v897
    %v902 = vadd.f32 %v885, %v898
    %v903 = vadd.f32 %v886, %v899
    %v904 = vld [vmem:[#allocation2 + $0x150] sm:$0xf]
    %v905 = vld [vmem:[#allocation2 + $0x154] sm:$0xf]
    %v906 = vld [vmem:[#allocation2 + $0x158] sm:$0xf]
    %v907 = vld [vmem:[#allocation2 + $0x15c] sm:$0xf]
    %v908 = vunpack.c.l.bf16 %v904
    %v909 = vunpack.c.l.bf16 %v905
    %v910 = vunpack.c.l.bf16 %v906
    %v911 = vunpack.c.l.bf16 %v907
    %v912 = vperm.slane %v545, 5
    %v913 = vmul.f32 %v908, %v912
    %v914 = vmul.f32 %v909, %v912
    %v915 = vmul.f32 %v910, %v912
    %v916 = vmul.f32 %v911, %v912
    %v917 = vadd.f32 %v900, %v913
    %v918 = vadd.f32 %v901, %v914
    %v919 = vadd.f32 %v902, %v915
    %v920 = vadd.f32 %v903, %v916
    %v921 = vld [vmem:[#allocation2 + $0x160] sm:$0xf]
    %v922 = vld [vmem:[#allocation2 + $0x164] sm:$0xf]
    %v923 = vld [vmem:[#allocation2 + $0x168] sm:$0xf]
    %v924 = vld [vmem:[#allocation2 + $0x16c] sm:$0xf]
    %v925 = vunpack.c.l.bf16 %v921
    %v926 = vunpack.c.l.bf16 %v922
    %v927 = vunpack.c.l.bf16 %v923
    %v928 = vunpack.c.l.bf16 %v924
    %v929 = vperm.slane %v545, 6
    %v930 = vmul.f32 %v925, %v929
    %v931 = vmul.f32 %v926, %v929
    %v932 = vmul.f32 %v927, %v929
    %v933 = vmul.f32 %v928, %v929
    %v934 = vadd.f32 %v917, %v930
    %v935 = vadd.f32 %v918, %v931
    %v936 = vadd.f32 %v919, %v932
    %v937 = vadd.f32 %v920, %v933
    %v938 = vld [vmem:[#allocation2 + $0x170] sm:$0xf]
    %v939 = vld [vmem:[#allocation2 + $0x174] sm:$0xf]
    %v940 = vld [vmem:[#allocation2 + $0x178] sm:$0xf]
    %v941 = vld [vmem:[#allocation2 + $0x17c] sm:$0xf]
    %v942 = vunpack.c.l.bf16 %v938
    %v943 = vunpack.c.l.bf16 %v939
    %v944 = vunpack.c.l.bf16 %v940
    %v945 = vunpack.c.l.bf16 %v941
    %v946 = vperm.slane %v545, 7
    %v947 = vmul.f32 %v942, %v946
    %v948 = vmul.f32 %v943, %v946
    %v949 = vmul.f32 %v944, %v946
    %v950 = vmul.f32 %v945, %v946
    %v951 = vadd.f32 %v934, %v947
    %v952 = vadd.f32 %v935, %v948
    %v953 = vadd.f32 %v936, %v949
    %v954 = vadd.f32 %v937, %v950
    %v955 = vld [vmem:[#allocation2 + $0x180] sm:$0xf]
    %v956 = vld [vmem:[#allocation2 + $0x184] sm:$0xf]
    %v957 = vld [vmem:[#allocation2 + $0x188] sm:$0xf]
    %v958 = vld [vmem:[#allocation2 + $0x18c] sm:$0xf]
    %v959 = vunpack.c.l.bf16 %v955
    %v960 = vunpack.c.l.bf16 %v956
    %v961 = vunpack.c.l.bf16 %v957
    %v962 = vunpack.c.l.bf16 %v958
    %v963 = vperm.slane %v546, 0
    %v964 = vmul.f32 %v959, %v963
    %v965 = vmul.f32 %v960, %v963
    %v966 = vmul.f32 %v961, %v963
    %v967 = vmul.f32 %v962, %v963
    %v968 = vadd.f32 %v951, %v964
    %v969 = vadd.f32 %v952, %v965
    %v970 = vadd.f32 %v953, %v966
    %v971 = vadd.f32 %v954, %v967
    %v972 = vld [vmem:[#allocation2 + $0x190] sm:$0xf]
    %v973 = vld [vmem:[#allocation2 + $0x194] sm:$0xf]
    %v974 = vld [vmem:[#allocation2 + $0x198] sm:$0xf]
    %v975 = vld [vmem:[#allocation2 + $0x19c] sm:$0xf]
    %v976 = vunpack.c.l.bf16 %v972
    %v977 = vunpack.c.l.bf16 %v973
    %v978 = vunpack.c.l.bf16 %v974
    %v979 = vunpack.c.l.bf16 %v975
    %v980 = vperm.slane %v546, 1
    %v981 = vmul.f32 %v976, %v980
    %v982 = vmul.f32 %v977, %v980
    %v983 = vmul.f32 %v978, %v980
    %v984 = vmul.f32 %v979, %v980
    %v985 = vadd.f32 %v968, %v981
    %v986 = vadd.f32 %v969, %v982
    %v987 = vadd.f32 %v970, %v983
    %v988 = vadd.f32 %v971, %v984
    %v989 = vld [vmem:[#allocation2 + $0x1a0] sm:$0xf]
    %v990 = vld [vmem:[#allocation2 + $0x1a4] sm:$0xf]
    %v991 = vld [vmem:[#allocation2 + $0x1a8] sm:$0xf]
    %v992 = vld [vmem:[#allocation2 + $0x1ac] sm:$0xf]
    %v993 = vunpack.c.l.bf16 %v989
    %v994 = vunpack.c.l.bf16 %v990
    %v995 = vunpack.c.l.bf16 %v991
    %v996 = vunpack.c.l.bf16 %v992
    %v997 = vperm.slane %v546, 2
    %v998 = vmul.f32 %v993, %v997
    %v999 = vmul.f32 %v994, %v997
    %v1000 = vmul.f32 %v995, %v997
    %v1001 = vmul.f32 %v996, %v997
    %v1002 = vadd.f32 %v985, %v998
    %v1003 = vadd.f32 %v986, %v999
    %v1004 = vadd.f32 %v987, %v1000
    %v1005 = vadd.f32 %v988, %v1001
    %v1006 = vld [vmem:[#allocation2 + $0x1b0] sm:$0xf]
    %v1007 = vld [vmem:[#allocation2 + $0x1b4] sm:$0xf]
    %v1008 = vld [vmem:[#allocation2 + $0x1b8] sm:$0xf]
    %v1009 = vld [vmem:[#allocation2 + $0x1bc] sm:$0xf]
    %v1010 = vunpack.c.l.bf16 %v1006
    %v1011 = vunpack.c.l.bf16 %v1007
    %v1012 = vunpack.c.l.bf16 %v1008
    %v1013 = vunpack.c.l.bf16 %v1009
    %v1014 = vperm.slane %v546, 3
    %v1015 = vmul.f32 %v1010, %v1014
    %v1016 = vmul.f32 %v1011, %v1014
    %v1017 = vmul.f32 %v1012, %v1014
    %v1018 = vmul.f32 %v1013, %v1014
    %v1019 = vadd.f32 %v1002, %v1015
    %v1020 = vadd.f32 %v1003, %v1016
    %v1021 = vadd.f32 %v1004, %v1017
    %v1022 = vadd.f32 %v1005, %v1018
    %v1023 = vld [vmem:[#allocation2 + $0x1c0] sm:$0xf]
    %v1024 = vld [vmem:[#allocation2 + $0x1c4] sm:$0xf]
    %v1025 = vld [vmem:[#allocation2 + $0x1c8] sm:$0xf]
    %v1026 = vld [vmem:[#allocation2 + $0x1cc] sm:$0xf]
    %v1027 = vunpack.c.l.bf16 %v1023
    %v1028 = vunpack.c.l.bf16 %v1024
    %v1029 = vunpack.c.l.bf16 %v1025
    %v1030 = vunpack.c.l.bf16 %v1026
    %v1031 = vperm.slane %v546, 4
    %v1032 = vmul.f32 %v1027, %v1031
    %v1033 = vmul.f32 %v1028, %v1031
    %v1034 = vmul.f32 %v1029, %v1031
    %v1035 = vmul.f32 %v1030, %v1031
    %v1036 = vadd.f32 %v1019, %v1032
    %v1037 = vadd.f32 %v1020, %v1033
    %v1038 = vadd.f32 %v1021, %v1034
    %v1039 = vadd.f32 %v1022, %v1035
    %v1040 = vld [vmem:[#allocation2 + $0x1d0] sm:$0xf]
    %v1041 = vld [vmem:[#allocation2 + $0x1d4] sm:$0xf]
    %v1042 = vld [vmem:[#allocation2 + $0x1d8] sm:$0xf]
    %v1043 = vld [vmem:[#allocation2 + $0x1dc] sm:$0xf]
    %v1044 = vunpack.c.l.bf16 %v1040
    %v1045 = vunpack.c.l.bf16 %v1041
    %v1046 = vunpack.c.l.bf16 %v1042
    %v1047 = vunpack.c.l.bf16 %v1043
    %v1048 = vperm.slane %v546, 5
    %v1049 = vmul.f32 %v1044, %v1048
    %v1050 = vmul.f32 %v1045, %v1048
    %v1051 = vmul.f32 %v1046, %v1048
    %v1052 = vmul.f32 %v1047, %v1048
    %v1053 = vadd.f32 %v1036, %v1049
    %v1054 = vadd.f32 %v1037, %v1050
    %v1055 = vadd.f32 %v1038, %v1051
    %v1056 = vadd.f32 %v1039, %v1052
    %v1057 = vld [vmem:[#allocation2 + $0x1e0] sm:$0xf]
    %v1058 = vld [vmem:[#allocation2 + $0x1e4] sm:$0xf]
    %v1059 = vld [vmem:[#allocation2 + $0x1e8] sm:$0xf]
    %v1060 = vld [vmem:[#allocation2 + $0x1ec] sm:$0xf]
    %v1061 = vunpack.c.l.bf16 %v1057
    %v1062 = vunpack.c.l.bf16 %v1058
    %v1063 = vunpack.c.l.bf16 %v1059
    %v1064 = vunpack.c.l.bf16 %v1060
    %v1065 = vperm.slane %v546, 6
    %v1066 = vmul.f32 %v1061, %v1065
    %v1067 = vmul.f32 %v1062, %v1065
    %v1068 = vmul.f32 %v1063, %v1065
    %v1069 = vmul.f32 %v1064, %v1065
    %v1070 = vadd.f32 %v1053, %v1066
    %v1071 = vadd.f32 %v1054, %v1067
    %v1072 = vadd.f32 %v1055, %v1068
    %v1073 = vadd.f32 %v1056, %v1069
    %v1074 = vld [vmem:[#allocation2 + $0x1f0] sm:$0xf]
    %v1075 = vld [vmem:[#allocation2 + $0x1f4] sm:$0xf]
    %v1076 = vld [vmem:[#allocation2 + $0x1f8] sm:$0xf]
    %v1077 = vld [vmem:[#allocation2 + $0x1fc] sm:$0xf]
    %v1078 = vunpack.c.l.bf16 %v1074
    %v1079 = vunpack.c.l.bf16 %v1075
    %v1080 = vunpack.c.l.bf16 %v1076
    %v1081 = vunpack.c.l.bf16 %v1077
    %v1082 = vperm.slane %v546, 7
    %v1083 = vmul.f32 %v1078, %v1082
    %v1084 = vmul.f32 %v1079, %v1082
    %v1085 = vmul.f32 %v1080, %v1082
    %v1086 = vmul.f32 %v1081, %v1082
    %v1087 = vadd.f32 %v1070, %v1083
    %v1088 = vadd.f32 %v1071, %v1084
    %v1089 = vadd.f32 %v1072, %v1085
    %v1090 = vadd.f32 %v1073, %v1086
    %1091 = vadd.xlane.f32.xlu0 %v1087
    %v1092 = vpop.xlane.xlu0 %1091
    %1093 = vadd.xlane.f32.xlu0 %v1088
    %v1094 = vpop.xlane.xlu0 %1093
    %1095 = vadd.xlane.f32.xlu0 %v1089
    %v1096 = vpop.xlane.xlu0 %1095
    %1097 = vadd.xlane.f32.xlu0 %v1090
    %v1098 = vpop.xlane.xlu0 %1097
    %v1099 = vadd.f32 %v1092, %v86
    %v1100 = vadd.f32 %v1094, %v87
    %v1101 = vadd.f32 %v1096, %v88
    %v1102 = vadd.f32 %v1098, %v89
    %v1103 = vmax.f32 %v1099, 0.0
    %v1104 = vmax.f32 %v1100, 0.0
    %v1105 = vmax.f32 %v1101, 0.0
    %v1106 = vmax.f32 %v1102, 0.0
    %v1107 = vld [vmem:[%s1] sm:$0x1]
    %1109 = vset.pattern.permute.xlu0 5
    %1110 = vperm.xlu0 %1109, %v1103
    %v1111 = vpop.permute.xlu0 %1110
    %1114 = vset.pattern.permute.xlu0 5
    %1115 = vperm.xlu0 %1114, %v1104
    %v1116 = vpop.permute.xlu0 %1115
    %1119 = vset.pattern.permute.xlu0 5
    %1120 = vperm.xlu0 %1119, %v1105
    %v1121 = vpop.permute.xlu0 %1120
    %1124 = vset.pattern.permute.xlu0 5
    %1125 = vperm.xlu0 %1124, %v1106
    %v1126 = vpop.permute.xlu0 %1125
    %v1128 = vmul.f32 %v86, %v1111
    %v1129 = vmul.f32 %v87, %v1116
    %v1130 = vmul.f32 %v88, %v1121
    %v1131 = vmul.f32 %v89, %v1126
    %vm1132 = vcmask 130112
    %v1133 = vsel %vm1132, %v1128, 0.0
    %v1134 = vsel %vm1132, %v1129, 0.0
    %v1135 = vadd.f32 %v1133, %v1134
    %v1136 = vsel %vm1132, %v1130, 0.0
    %v1137 = vadd.f32 %v1135, %v1136
    %v1138 = vsel %vm1132, %v1131, 0.0
    %v1139 = vadd.f32 %v1137, %v1138
    %v1140 = vrot.slane %v1139, 4
    %v1141 = vadd.f32 %v1139, %v1140
    %v1142 = vrot.slane %v1141, 2
    %v1143 = vadd.f32 %v1141, %v1142
    %v1144 = vrot.slane %v1143, 1
    %v1145 = vadd.f32 %v1143, %v1144
    %1147 = vrot.lane.b32.xlu0 %v1107, 120
    %v1148 = vpop.permute.xlu0 %1147
    %v1150 = vadd.f32 %v1145, %v1148
    %1152 = vrot.lane.b32.xlu0 %v1150, 120
    %v1153 = vpop.permute.xlu0 %1152
    %vm1155 = vcmask 57344
    %1156 = vst.msk [vmem:[%s3] sm:$0x1] %vm1155, %v1153
    // Predicated region
    $region18: #{model_forward.1} parent=1 // pred_check
      _
    $region19: #{model_forward.1} parent=1 // pred_check_branch
      %1158 = sbr.rel (0) target = $region21
    $region20: #{model_forward.1} parent=1 // pred_region
      _
    $region21: #{model_forward.1} parent=1 // pred_fallthru
      _
    // Predicated region
    $region22: #{model_forward.1} parent=1 // pred_check
      _
    $region23: #{model_forward.1} parent=1 // pred_check_branch
      %1160 = sbr.rel (0) target = $region25
    $region24: #{model_forward.1} parent=1 // pred_region
      _
    $region25: #{model_forward.1} parent=1 // pred_fallthru
      _
    %1161 = vsyncpa [#allocation3], 1

</llo_original>
